<compile_context>
chip_gen: v6e
topology: v6e:2x2x1
jax: 0.10.0
libtpu: 0.0.40
codegen_flags: <defaults>
</compile_context>

<pallas_src>
import functools

import jax
import jax.numpy as jnp
from jax.experimental import pallas as pl
from jax.experimental.pallas import tpu as pltpu


_VMEM_LIMIT_BYTES = 48 * 1024 * 1024  # leaves headroom inside v7x's 64 MiB VMEM


def _pick_tile(dim, target):
    """Largest tile <= target that divides dim and is sublane(8)-aligned."""
    if dim <= target:
        return dim
    for t in range(target, 7, -1):
        if dim % t == 0 and t % 8 == 0:
            return t
    return dim


# ---------------------------------------------------------------------------
# Kernel A: fused QKV projection -> head-major Q/K/V (bf16), scale folded in Q
# ---------------------------------------------------------------------------
def _qkv_proj_kernel(x_ref, w_ref, b_ref, q_ref, k_ref, v_ref,
                     *, num_heads, d_k, scale):
    # x_ref: (1, TM, D) f32   w_ref: (D, 3D) bf16   b_ref: (1, 3D) f32
    # q/k/v_ref: (1, H, TM, d_k) bf16
    x = x_ref[0].astype(jnp.bfloat16)                          # (TM, D)
    qkv = jnp.dot(x, w_ref[...], preferred_element_type=jnp.float32)
    qkv = qkv + b_ref[0]                                       # (TM, 3D) f32
    d_model = num_heads * d_k
    for h in range(num_heads):                                 # lane-aligned slices
        lo = h * d_k
        q_ref[0, h] = (qkv[:, lo:lo + d_k] * scale).astype(q_ref.dtype)
        k_ref[0, h] = qkv[:, d_model + lo:d_model + lo + d_k].astype(k_ref.dtype)
        v_ref[0, h] = qkv[:, 2 * d_model + lo:2 * d_model + lo + d_k].astype(v_ref.dtype)


# ---------------------------------------------------------------------------
# Kernel B: flash attention over KV tiles (head-batched) + fused output proj
# ---------------------------------------------------------------------------
def _flash_attn_kernel(q_ref, k_ref, v_ref, wo_ref, o_ref,
                       m_scr, l_scr, acc_scr, *, num_heads, d_k):
    # q_ref: (1, H, TQ, d_k) bf16 (pre-scaled)   k/v_ref: (1, H, TKV, d_k) bf16
    # wo_ref: (D, D) bf16                        o_ref: (1, TQ, D)
    # scratch: m/l (H, TQ, 1) f32, acc (H, TQ, d_k) f32
    kv_idx = pl.program_id(2)

    @pl.when(kv_idx == 0)
    def _():
        m_scr[...] = jnp.full_like(m_scr, -jnp.inf)
        l_scr[...] = jnp.zeros_like(l_scr)
        acc_scr[...] = jnp.zeros_like(acc_scr)

    q = q_ref[0]                                               # (H, TQ, d_k)
    k = k_ref[0]                                               # (H, TKV, d_k)
    v = v_ref[0]                                               # (H, TKV, d_k)

    # Scores: contract d_k directly (no explicit transpose), bf16 in / f32 acc.
    s = jnp.einsum('hqd,hkd->hqk', q, k,
                   preferred_element_type=jnp.float32)         # (H, TQ, TKV) f32

    m_prev = m_scr[...]                                        # (H, TQ, 1)
    m_new = jnp.maximum(m_prev, jnp.max(s, axis=-1, keepdims=True))
    alpha = jnp.exp(m_prev - m_new)                            # (H, TQ, 1)
    p = jnp.exp(s - m_new)                                     # (H, TQ, TKV) f32
    l_scr[...] = alpha * l_scr[...] + jnp.sum(p, axis=-1, keepdims=True)
    acc_scr[...] = alpha * acc_scr[...] + jnp.einsum(
        'hqk,hkd->hqd', p.astype(v.dtype), v,
        preferred_element_type=jnp.float32)                    # (H, TQ, d_k) f32
    m_scr[...] = m_new

    @pl.when(kv_idx == pl.num_programs(2) - 1)
    def _():
        # Normalize on the small (H, TQ, d_k) accumulator; reciprocal -> EUP.
        attn = acc_scr[...] * pl.reciprocal(l_scr[...], approx=True)
        wo = wo_ref[...]                                       # (D, D) bf16
        # Output projection: sum_h attn_h @ wo[h*d_k:(h+1)*d_k, :] — no head
        # concat / relayout; each term is a full-width MXU matmul.
        out = jnp.dot(attn[0].astype(jnp.bfloat16), wo[0:d_k, :],
                      preferred_element_type=jnp.float32)      # (TQ, D)
        for h in range(1, num_heads):
            out = out + jnp.dot(attn[h].astype(jnp.bfloat16),
                                wo[h * d_k:(h + 1) * d_k, :],
                                preferred_element_type=jnp.float32)
        o_ref[0] = out.astype(o_ref.dtype)


# ---------------------------------------------------------------------------
# Wrapper
# ---------------------------------------------------------------------------
def multi_head_attention(x, w_qkv, b_qkv, w_o, *, num_heads):
    """x: (B, S, D); w_qkv: (D, 3D); b_qkv: (3D,); w_o: (D, D)."""
    B, S, D = x.shape
    assert D % num_heads == 0
    d_k = D // num_heads
    H = num_heads
    scale = 1.0 / (d_k ** 0.5)

    tm = _pick_tile(S, 256)    # projection tile over sequence
    tq = _pick_tile(S, 256)    # query tile
    tkv = _pick_tile(S, 512)   # kv tile

    b_qkv2d = b_qkv.reshape(1, 3 * D).astype(jnp.float32)
    w_qkv_bf = w_qkv.astype(jnp.bfloat16)
    w_o_bf = w_o.astype(jnp.bfloat16)

    # ---- Kernel A: QKV projection -> (B, H, S, d_k) x3 in bf16 -------------
    head_out_spec = pl.BlockSpec((1, H, tm, d_k), lambda b, i: (b, 0, i, 0))
    qkv_cost = pl.CostEstimate(
        flops=2 * B * S * D * 3 * D,
        transcendentals=0,
        bytes_accessed=4 * B * S * D + 2 * D * 3 * D + 4 * 3 * D + 2 * 3 * B * S * D)

    q, k, v = pl.pallas_call(
        functools.partial(_qkv_proj_kernel, num_heads=H, d_k=d_k, scale=scale),
        out_shape=(
            jax.ShapeDtypeStruct((B, H, S, d_k), jnp.bfloat16),
            jax.ShapeDtypeStruct((B, H, S, d_k), jnp.bfloat16),
            jax.ShapeDtypeStruct((B, H, S, d_k), jnp.bfloat16),
        ),
        grid_spec=pltpu.PrefetchScalarGridSpec(
            num_scalar_prefetch=0,
            grid=(B, S // tm),
            in_specs=[
                pl.BlockSpec((1, tm, D), lambda b, i: (b, i, 0)),
                pl.BlockSpec((D, 3 * D), lambda b, i: (0, 0)),
                pl.BlockSpec((1, 3 * D), lambda b, i: (0, 0)),
            ],
            out_specs=[head_out_spec, head_out_spec, head_out_spec],
        ),
        compiler_params=pltpu.CompilerParams(
            dimension_semantics=("parallel", "parallel"),
            vmem_limit_bytes=_VMEM_LIMIT_BYTES),
        cost_estimate=qkv_cost,
    )(x, w_qkv_bf, b_qkv2d)

    # ---- Kernel B: flash attention + fused output projection ---------------
    attn_cost = pl.CostEstimate(
        flops=4 * B * H * S * S * d_k + 2 * B * S * D * D,
        transcendentals=B * H * S * S,
        bytes_accessed=2 * 3 * B * S * D + 2 * D * D + 4 * B * S * D)

    out = pl.pallas_call(
        functools.partial(_flash_attn_kernel, num_heads=H, d_k=d_k),
        out_shape=jax.ShapeDtypeStruct((B, S, D), x.dtype),
        grid_spec=pltpu.PrefetchScalarGridSpec(
            num_scalar_prefetch=0,
            grid=(B, S // tq, S // tkv),
            in_specs=[
                pl.BlockSpec((1, H, tq, d_k), lambda b, qi, ki: (b, 0, qi, 0)),
                pl.BlockSpec((1, H, tkv, d_k), lambda b, qi, ki: (b, 0, ki, 0)),
                pl.BlockSpec((1, H, tkv, d_k), lambda b, qi, ki: (b, 0, ki, 0)),
                pl.BlockSpec((D, D), lambda b, qi, ki: (0, 0)),
            ],
            out_specs=pl.BlockSpec((1, tq, D), lambda b, qi, ki: (b, qi, 0)),
            scratch_shapes=[
                pltpu.VMEM((H, tq, 1), jnp.float32),     # running max
                pltpu.VMEM((H, tq, 1), jnp.float32),     # running denom
                pltpu.VMEM((H, tq, d_k), jnp.float32),   # running numerator
            ],
        ),
        compiler_params=pltpu.CompilerParams(
            dimension_semantics=("parallel", "parallel", "arbitrary"),
            vmem_limit_bytes=_VMEM_LIMIT_BYTES),
        cost_estimate=attn_cost,
    )(q, k, v, w_o_bf)

    return out


# ---------------------------------------------------------------------------
# Plain-JAX reference mirroring the PyTorch forward (f32)
# ---------------------------------------------------------------------------
def multi_head_attention_ref(x, w_qkv, b_qkv, w_o, *, num_heads):
    B, S, D = x.shape
    d_k = D // num_heads
    qkv = x @ w_qkv + b_qkv
    q, k, v = jnp.split(qkv, 3, axis=-1)

    def heads(t):
        return t.reshape(B, S, num_heads, d_k).transpose(0, 2, 1, 3)  # (B,H,S,dk)

    q, k, v = heads(q), heads(k), heads(v)
    scores = jnp.einsum("bhqd,bhkd->bhqk", q, k) / (d_k ** 0.5)
    attn = jax.nn.softmax(scores, axis=-1)
    out = jnp.einsum("bhqk,bhkd->bhqd", attn, v)
    out = out.transpose(0, 2, 1, 3).reshape(B, S, D)
    return out @ w_o


if __name__ == "__main__":
    # Small but lane-aligned shapes (d_k = 128, D multiple of 128).
    B, S, d_model, num_heads = 2, 128, 256, 2

    key = jax.random.PRNGKey(0)
    kx, kw1, kb1, kw2 = jax.random.split(key, 4)

    x = jax.random.normal(kx, (B, S, d_model), dtype=jnp.float32)
    # Parameters in (in, out) layout (equivalent to PyTorch x @ W.T).
    w_qkv = jax.random.normal(kw1, (d_model, 3 * d_model), dtype=jnp.float32) * 0.05
    b_qkv = jax.random.normal(kb1, (3 * d_model,), dtype=jnp.float32) * 0.05
    w_o = jax.random.normal(kw2, (d_model, d_model), dtype=jnp.float32) * 0.05

    out = multi_head_attention(x, w_qkv, b_qkv, w_o, num_heads=num_heads)
    out = jax.block_until_ready(out)

    ref = multi_head_attention_ref(x, w_qkv, b_qkv, w_o, num_heads=num_heads)
    assert out.shape == (B, S, d_model)
    # bf16 MXU inputs + approx reciprocal -> relaxed (but still tight) tolerance.
    assert jnp.allclose(out, ref, atol=5e-2, rtol=5e-2), (
        "mismatch vs reference, max abs err = "
        + str(float(jnp.max(jnp.abs(out - ref)))))

    print("KERNEL_OK")
</pallas_src>

<mosaic_0001>
module attributes {stable_mosaic.version = 11 : i64} {
  func.func @_qkv_proj_kernel(%arg0: i32, %arg1: i32, %arg2: memref<1x128x256xf32, #tpu.memory_space<vmem>>, %arg3: memref<256x768xbf16, #tpu.memory_space<vmem>>, %arg4: memref<1x768xf32, #tpu.memory_space<vmem>>, %arg5: memref<1x2x128x128xbf16, #tpu.memory_space<vmem>>, %arg6: memref<1x2x128x128xbf16, #tpu.memory_space<vmem>>, %arg7: memref<1x2x128x128xbf16, #tpu.memory_space<vmem>>) attributes {dimension_semantics = [#tpu.dimension_semantics<parallel>, #tpu.dimension_semantics<parallel>], iteration_bounds = array<i64: 2, 1>, scalar_prefetch = 0 : i64, scratch_operands = 0 : i64, tpu.core_type = #tpu.core_type<tc>, window_params = [{transform_indices = @transform_0, window_bounds = array<i64: 1, 128, 256>}, {pipeline_mode = #tpu.pipeline_mode<synchronous>, transform_indices = @transform_1, window_bounds = array<i64: 256, 768>}, {pipeline_mode = #tpu.pipeline_mode<synchronous>, transform_indices = @transform_2, window_bounds = array<i64: 1, 768>}, {transform_indices = @transform_3, window_bounds = array<i64: 1, 2, 128, 128>}, {transform_indices = @transform_4, window_bounds = array<i64: 1, 2, 128, 128>}, {transform_indices = @transform_5, window_bounds = array<i64: 1, 2, 128, 128>}]} {
    %c0 = arith.constant 0 : index
    %c0_0 = arith.constant 0 : index
    %c0_1 = arith.constant 0 : index
    %0 = vector.load %arg2[%c0, %c0_0, %c0_1] : memref<1x128x256xf32, #tpu.memory_space<vmem>>, vector<1x128x256xf32>
    %1 = vector.shape_cast %0 : vector<1x128x256xf32> to vector<128x256xf32>
    %2 = arith.truncf %1 : vector<128x256xf32> to vector<128x256xbf16>
    %c0_2 = arith.constant 0 : index
    %c0_3 = arith.constant 0 : index
    %3 = vector.load %arg3[%c0_2, %c0_3] : memref<256x768xbf16, #tpu.memory_space<vmem>>, vector<256x768xbf16>
    %cst = arith.constant dense<0.000000e+00> : vector<128x768xf32>
    %4 = tpu.matmul %2, %3, %cst {dimension_numbers = #tpu.dot_dimension_numbers<[1], [0], [0], [1], [0, 0, 1, 1], [], []>} : vector<128x256xbf16>, vector<256x768xbf16>, vector<128x768xf32> -> vector<128x768xf32>
    %c0_4 = arith.constant 0 : index
    %c0_5 = arith.constant 0 : index
    %5 = vector.load %arg4[%c0_4, %c0_5] : memref<1x768xf32, #tpu.memory_space<vmem>>, vector<1x768xf32>
    %6 = vector.shape_cast %5 : vector<1x768xf32> to vector<768xf32>
    %7 = vector.shape_cast %6 : vector<768xf32> to vector<1x768xf32>
    %8 = vector.broadcast %7 : vector<1x768xf32> to vector<128x768xf32>
    %9 = arith.addf %4, %8 : vector<128x768xf32>
    %10 = vector.extract_strided_slice %9 {offsets = [0, 0], sizes = [128, 128], strides = [1, 1]} : vector<128x768xf32> to vector<128x128xf32>
    %cst_6 = arith.constant 0.0883883461 : f32
    %11 = vector.broadcast %cst_6 : f32 to vector<128x128xf32>
    %12 = arith.mulf %10, %11 : vector<128x128xf32>
    %13 = arith.truncf %12 : vector<128x128xf32> to vector<128x128xbf16>
    %c0_7 = arith.constant 0 : index
    %c0_8 = arith.constant 0 : index
    %c0_9 = arith.constant 0 : index
    %c0_10 = arith.constant 0 : index
    %14 = vector.load %arg5[%c0_7, %c0_8, %c0_9, %c0_10] : memref<1x2x128x128xbf16, #tpu.memory_space<vmem>>, vector<1x1x128x128xbf16>
    %15 = vector.shape_cast %14 : vector<1x1x128x128xbf16> to vector<128x128xbf16>
    %16 = vector.shape_cast %13 : vector<128x128xbf16> to vector<1x1x128x128xbf16>
    tpu.vector_store %arg5[%c0_7, %c0_8, %c0_9, %c0_10], %16 {strides = array<i32>} : memref<1x2x128x128xbf16, #tpu.memory_space<vmem>>, vector<1x1x128x128xbf16>,
    %17 = vector.extract_strided_slice %9 {offsets = [0, 256], sizes = [128, 128], strides = [1, 1]} : vector<128x768xf32> to vector<128x128xf32>
    %18 = arith.truncf %17 : vector<128x128xf32> to vector<128x128xbf16>
    %c0_11 = arith.constant 0 : index
    %c0_12 = arith.constant 0 : index
    %c0_13 = arith.constant 0 : index
    %c0_14 = arith.constant 0 : index
    %19 = vector.load %arg6[%c0_11, %c0_12, %c0_13, %c0_14] : memref<1x2x128x128xbf16, #tpu.memory_space<vmem>>, vector<1x1x128x128xbf16>
    %20 = vector.shape_cast %19 : vector<1x1x128x128xbf16> to vector<128x128xbf16>
    %21 = vector.shape_cast %18 : vector<128x128xbf16> to vector<1x1x128x128xbf16>
    tpu.vector_store %arg6[%c0_11, %c0_12, %c0_13, %c0_14], %21 {strides = array<i32>} : memref<1x2x128x128xbf16, #tpu.memory_space<vmem>>, vector<1x1x128x128xbf16>,
    %22 = vector.extract_strided_slice %9 {offsets = [0, 512], sizes = [128, 128], strides = [1, 1]} : vector<128x768xf32> to vector<128x128xf32>
    %23 = arith.truncf %22 : vector<128x128xf32> to vector<128x128xbf16>
    %c0_15 = arith.constant 0 : index
    %c0_16 = arith.constant 0 : index
    %c0_17 = arith.constant 0 : index
    %c0_18 = arith.constant 0 : index
    %24 = vector.load %arg7[%c0_15, %c0_16, %c0_17, %c0_18] : memref<1x2x128x128xbf16, #tpu.memory_space<vmem>>, vector<1x1x128x128xbf16>
    %25 = vector.shape_cast %24 : vector<1x1x128x128xbf16> to vector<128x128xbf16>
    %26 = vector.shape_cast %23 : vector<128x128xbf16> to vector<1x1x128x128xbf16>
    tpu.vector_store %arg7[%c0_15, %c0_16, %c0_17, %c0_18], %26 {strides = array<i32>} : memref<1x2x128x128xbf16, #tpu.memory_space<vmem>>, vector<1x1x128x128xbf16>,
    %27 = vector.extract_strided_slice %9 {offsets = [0, 128], sizes = [128, 128], strides = [1, 1]} : vector<128x768xf32> to vector<128x128xf32>
    %cst_19 = arith.constant 0.0883883461 : f32
    %28 = vector.broadcast %cst_19 : f32 to vector<128x128xf32>
    %29 = arith.mulf %27, %28 : vector<128x128xf32>
    %30 = arith.truncf %29 : vector<128x128xf32> to vector<128x128xbf16>
    %c0_20 = arith.constant 0 : index
    %c1 = arith.constant 1 : index
    %c0_21 = arith.constant 0 : index
    %c0_22 = arith.constant 0 : index
    %31 = vector.load %arg5[%c0_20, %c1, %c0_21, %c0_22] : memref<1x2x128x128xbf16, #tpu.memory_space<vmem>>, vector<1x1x128x128xbf16>
    %32 = vector.shape_cast %31 : vector<1x1x128x128xbf16> to vector<128x128xbf16>
    %33 = vector.shape_cast %30 : vector<128x128xbf16> to vector<1x1x128x128xbf16>
    tpu.vector_store %arg5[%c0_20, %c1, %c0_21, %c0_22], %33 {strides = array<i32>} : memref<1x2x128x128xbf16, #tpu.memory_space<vmem>>, vector<1x1x128x128xbf16>,
    %34 = vector.extract_strided_slice %9 {offsets = [0, 384], sizes = [128, 128], strides = [1, 1]} : vector<128x768xf32> to vector<128x128xf32>
    %35 = arith.truncf %34 : vector<128x128xf32> to vector<128x128xbf16>
    %c0_23 = arith.constant 0 : index
    %c1_24 = arith.constant 1 : index
    %c0_25 = arith.constant 0 : index
    %c0_26 = arith.constant 0 : index
    %36 = vector.load %arg6[%c0_23, %c1_24, %c0_25, %c0_26] : memref<1x2x128x128xbf16, #tpu.memory_space<vmem>>, vector<1x1x128x128xbf16>
    %37 = vector.shape_cast %36 : vector<1x1x128x128xbf16> to vector<128x128xbf16>
    %38 = vector.shape_cast %35 : vector<128x128xbf16> to vector<1x1x128x128xbf16>
    tpu.vector_store %arg6[%c0_23, %c1_24, %c0_25, %c0_26], %38 {strides = array<i32>} : memref<1x2x128x128xbf16, #tpu.memory_space<vmem>>, vector<1x1x128x128xbf16>,
    %39 = vector.extract_strided_slice %9 {offsets = [0, 640], sizes = [128, 128], strides = [1, 1]} : vector<128x768xf32> to vector<128x128xf32>
    %40 = arith.truncf %39 : vector<128x128xf32> to vector<128x128xbf16>
    %c0_27 = arith.constant 0 : index
    %c1_28 = arith.constant 1 : index
    %c0_29 = arith.constant 0 : index
    %c0_30 = arith.constant 0 : index
    %41 = vector.load %arg7[%c0_27, %c1_28, %c0_29, %c0_30] : memref<1x2x128x128xbf16, #tpu.memory_space<vmem>>, vector<1x1x128x128xbf16>
    %42 = vector.shape_cast %41 : vector<1x1x128x128xbf16> to vector<128x128xbf16>
    %43 = vector.shape_cast %40 : vector<128x128xbf16> to vector<1x1x128x128xbf16>
    tpu.vector_store %arg7[%c0_27, %c1_28, %c0_29, %c0_30], %43 {strides = array<i32>} : memref<1x2x128x128xbf16, #tpu.memory_space<vmem>>, vector<1x1x128x128xbf16>,
    return
  }
  func.func @transform_0(%arg0: i32, %arg1: i32) -> (i32, i32, i32) {
    %c0_i32 = arith.constant 0 : i32
    %c0_i32_0 = arith.constant 0 : i32
    return %arg0, %arg1, %c0_i32 : i32, i32, i32
  }
  func.func @transform_1(%arg0: i32, %arg1: i32) -> (i32, i32) {
    %c0_i32 = arith.constant 0 : i32
    %c0_i32_0 = arith.constant 0 : i32
    %c0_i32_1 = arith.constant 0 : i32
    return %c0_i32, %c0_i32_0 : i32, i32
  }
  func.func @transform_2(%arg0: i32, %arg1: i32) -> (i32, i32) {
    %c0_i32 = arith.constant 0 : i32
    %c0_i32_0 = arith.constant 0 : i32
    %c0_i32_1 = arith.constant 0 : i32
    return %c0_i32, %c0_i32_0 : i32, i32
  }
  func.func @transform_3(%arg0: i32, %arg1: i32) -> (i32, i32, i32, i32) {
    %c0_i32 = arith.constant 0 : i32
    %c0_i32_0 = arith.constant 0 : i32
    %c0_i32_1 = arith.constant 0 : i32
    return %arg0, %c0_i32, %arg1, %c0_i32_0 : i32, i32, i32, i32
  }
  func.func @transform_4(%arg0: i32, %arg1: i32) -> (i32, i32, i32, i32) {
    %c0_i32 = arith.constant 0 : i32
    %c0_i32_0 = arith.constant 0 : i32
    %c0_i32_1 = arith.constant 0 : i32
    return %arg0, %c0_i32, %arg1, %c0_i32_0 : i32, i32, i32, i32
  }
  func.func @transform_5(%arg0: i32, %arg1: i32) -> (i32, i32, i32, i32) {
    %c0_i32 = arith.constant 0 : i32
    %c0_i32_0 = arith.constant 0 : i32
    %c0_i32_1 = arith.constant 0 : i32
    return %arg0, %c0_i32, %arg1, %c0_i32_0 : i32, i32, i32, i32
  }
}

</mosaic_0001>

<llo_original>
// kernel: tpu_custom_call.1
$region0: #{tpu_custom_call.1}
  #allocation0 [shape = 'u32[]', space=smem, size = 0x4, offset = 0x4, fixed_abs, tag = 'smem constant byte address 0x4 - core index']
  #allocation1 [shape = 'u32[144,128]{1,0:T(1,128)}', space=vmem, size = 0x12000, scoped, tag = 'internal scratch']
  %s0 = inlined_call_operand.hbm [shape: f32[2,128,256], index: 0, kind: input, shape index: {}]
  %s1 = inlined_call_operand.hbm [shape: bf16[256,768], index: 1, kind: input, shape index: {}]
  %s2 = inlined_call_operand.hbm [shape: f32[1,768], index: 2, kind: input, shape index: {}]
  %s3 = inlined_call_operand.hbm [shape: bf16[2,2,128,128], index: 3, kind: output, shape index: {0}]
  %s4 = inlined_call_operand.hbm [shape: bf16[2,2,128,128], index: 4, kind: output, shape index: {1}]
  %s5 = inlined_call_operand.hbm [shape: bf16[2,2,128,128], index: 5, kind: output, shape index: {2}]
  %6 = xla_tuple %s3, %s4, %s5
  %s7 = sld [smem:[#allocation0]]
  $region73: #{tpu_custom_call.1} parent=0
    _
  %s9 = ssub.s32 1, %s7
  %s10 = scalar_select 0, %s9, %s7
  $region1: #{tpu_custom_call.1} parent=0
    #allocation2 [shape = 'u8[262144]{0}', space=vmem, size = 0x40000, scoped, tag = 'input window, operand 0']
    #allocation3 [shape = 's32[2]{0}', space=sflag, size = 0x8, scoped, tag = 'scoped memory for tpu_custom_call.1']
    #allocation4 [shape = 's32[2]{0}', space=sflag, size = 0x8, scoped, tag = 'scoped memory for tpu_custom_call.1']
    #allocation5 [shape = 'u8[393216]{0}', space=vmem, size = 0x60000, scoped, tag = 'input window, operand 1, single buffered']
    #allocation6 [shape = 's32[1]{0}', space=sflag, size = 0x4, scoped, tag = 'scoped memory for tpu_custom_call.1']
    #allocation7 [shape = 'u8[3072]{0}', space=vmem, size = 0xc00, scoped, tag = 'input window, operand 2, single buffered']
    #allocation8 [shape = 'u8[131072]{0}', space=vmem, size = 0x20000, scoped, tag = 'output window, operand 0']
    #allocation9 [shape = 'u8[131072]{0}', space=vmem, size = 0x20000, scoped, tag = 'output window, operand 1']
    #allocation10 [shape = 's32[2]{0}', space=sflag, size = 0x8, scoped, tag = 'scoped memory for tpu_custom_call.1']
    #allocation11 [shape = 'u8[131072]{0}', space=vmem, size = 0x20000, scoped, tag = 'output window, operand 2']
    %11 = vsyncpa [#allocation3], 0
    %s12 = scalar_lea.sflag [#allocation3], 1
    %13 = vsyncpa %s12, 0
    %14 = vsyncpa [#allocation6], 0
    %15 = vsyncpa [#allocation4], 0
    %s16 = scalar_lea.sflag [#allocation4], 1
    %17 = vsyncpa %s16, 0
    %18 = vsyncpa [#allocation10], 0
    %s19 = scalar_lea.sflag [#allocation10], 1
    %20 = vsyncpa %s19, 0
    loop: start=0, step=1, limit=4
    $region2: #{tpu_custom_call.1} parent=1 // loop_pre_header
      _
    $region3: #{tpu_custom_call.1} parent=1 // loop_header
      %s22 = sphi 0, %s26
      %p23 = scmp.ge.s32.totalorder %s22, 4
      %s29 = sphi 0, %s41
      %s30 = sphi 0, %s37
      %s31 = sphi 0, %s29
      %s32 = sphi 0, %s30
      %s33 = sphi 0, %s31
      %s34 = sphi 0, %s32
      %s46 = sphi 0, %s48
      %s49 = sphi 0, %s46
      %s50 = sphi 0, %s49
      %s66 = sphi 0, %s50
      %s70 = sphi 0, %s70
      %s72 = sphi 0, %s70
      %s73 = sphi 0, %s72
      %s87 = sphi 0, %s73
      %s91 = sphi 0, %s91
      %s93 = sphi 0, %s91
      %s94 = sphi 0, %s93
      %s108 = sphi 0, %s94
      %s116 = sphi 0, %s118
      %s119 = sphi 0, %s116
      %s120 = sphi 0, %s119
      %s136 = sphi 0, %s120
      %s144 = sphi 0, %s146
      %s147 = sphi 0, %s144
      %s148 = sphi 0, %s147
      %s164 = sphi 0, %s148
      %s172 = sphi 0, %s174
      %s175 = sphi 0, %s172
      %s176 = sphi 0, %s175
      %s192 = sphi 0, %s176
    $region4: #{tpu_custom_call.1} parent=1 // loop_header_branch
      %25 = sbr.rel (%p23) target = $region8
    $region5: #{tpu_custom_call.1} parent=1 // loop_body
      %s27 = ssub.s32 %s22, 1
      %s28 = ssub.s32 %s22, 2
      %s35 = sadd.s32 1, %s30
      %p36 = scmp.ge.s32.totalorder %s35, 1
      %s37 = scalar_select %p36, 0, %s35
      %s38 = sadd.s32 1, %s29
      %s39 = scalar_select %p36, %s38, %s29
      %p40 = scmp.ge.s32.totalorder %s39, 2
      %s41 = scalar_select %p40, 0, %s39
      %s42 = ssub.s32 %s29, %s41
      %s43 = ssub.s32 %s30, %s37
      %s44 = sor.u32 %s42, %s43
      %p45 = scmp.eq.s32.totalorder %s44, 0
      %s47 = sadd.s32 %s46, 1
      %s48 = scalar_select %p45, %s46, %s47
      %p51 = pneg %p45
      %p52 = scmp.eq.s32.totalorder %s22, 1
      %p53 = por %p51, %p52
      %p54 = scmp.ne.s32.totalorder %s46, %s49
      %p55 = scmp.eq.s32.totalorder %s22, 0
      %p56 = por %p54, %p55
      %p57 = scmp.ne.s32.totalorder %s46, %s49
      %p58 = scmp.eq.s32.totalorder %s27, 1
      %p59 = por %p57, %p58
      %p60 = scmp.ne.s32.totalorder %s49, %s50
      %p61 = scmp.eq.s32.totalorder %s27, 0
      %p62 = por %p60, %p61
      %p63 = scmp.ne.s32.totalorder %s49, %s50
      %p64 = scmp.eq.s32.totalorder %s28, 1
      %p65 = por %p63, %p64
      %p67 = scmp.ne.s32.totalorder %s50, %s66
      %p68 = scmp.eq.s32.totalorder %s28, 0
      %p69 = por %p67, %p68
      %s71 = sadd.s32 %s70, 1
      %p74 = scmp.eq.s32.totalorder %s22, 1
      %p75 = scmp.ne.s32.totalorder %s70, %s72
      %p76 = scmp.eq.s32.totalorder %s22, 0
      %p77 = por %p75, %p76
      %p78 = scmp.ne.s32.totalorder %s70, %s72
      %p79 = scmp.eq.s32.totalorder %s27, 1
      %p80 = por %p78, %p79
      %p81 = scmp.ne.s32.totalorder %s72, %s73
      %p82 = scmp.eq.s32.totalorder %s27, 0
      %p83 = por %p81, %p82
      %p84 = scmp.ne.s32.totalorder %s72, %s73
      %p85 = scmp.eq.s32.totalorder %s28, 1
      %p86 = por %p84, %p85
      %p88 = scmp.ne.s32.totalorder %s73, %s87
      %p89 = scmp.eq.s32.totalorder %s28, 0
      %p90 = por %p88, %p89
      %s92 = sadd.s32 %s91, 1
      %p95 = scmp.eq.s32.totalorder %s22, 1
      %p96 = scmp.ne.s32.totalorder %s91, %s93
      %p97 = scmp.eq.s32.totalorder %s22, 0
      %p98 = por %p96, %p97
      %p99 = scmp.ne.s32.totalorder %s91, %s93
      %p100 = scmp.eq.s32.totalorder %s27, 1
      %p101 = por %p99, %p100
      %p102 = scmp.ne.s32.totalorder %s93, %s94
      %p103 = scmp.eq.s32.totalorder %s27, 0
      %p104 = por %p102, %p103
      %p105 = scmp.ne.s32.totalorder %s93, %s94
      %p106 = scmp.eq.s32.totalorder %s28, 1
      %p107 = por %p105, %p106
      %p109 = scmp.ne.s32.totalorder %s94, %s108
      %p110 = scmp.eq.s32.totalorder %s28, 0
      %p111 = por %p109, %p110
      %s112 = ssub.s32 %s29, %s41
      %s113 = ssub.s32 %s30, %s37
      %s114 = sor.u32 %s112, %s113
      %p115 = scmp.eq.s32.totalorder %s114, 0
      %s117 = sadd.s32 %s116, 1
      %s118 = scalar_select %p115, %s116, %s117
      %p121 = pneg %p115
      %p122 = scmp.eq.s32.totalorder %s22, 1
      %p123 = por %p121, %p122
      %p124 = scmp.ne.s32.totalorder %s116, %s119
      %p125 = scmp.eq.s32.totalorder %s22, 0
      %p126 = por %p124, %p125
      %p127 = scmp.ne.s32.totalorder %s116, %s119
      %p128 = scmp.eq.s32.totalorder %s27, 1
      %p129 = por %p127, %p128
      %p130 = scmp.ne.s32.totalorder %s119, %s120
      %p131 = scmp.eq.s32.totalorder %s27, 0
      %p132 = por %p130, %p131
      %p133 = scmp.ne.s32.totalorder %s119, %s120
      %p134 = scmp.eq.s32.totalorder %s28, 1
      %p135 = por %p133, %p134
      %p137 = scmp.ne.s32.totalorder %s120, %s136
      %p138 = scmp.eq.s32.totalorder %s28, 0
      %p139 = por %p137, %p138
      %s140 = ssub.s32 %s29, %s41
      %s141 = ssub.s32 %s30, %s37
      %s142 = sor.u32 %s140, %s141
      %p143 = scmp.eq.s32.totalorder %s142, 0
      %s145 = sadd.s32 %s144, 1
      %s146 = scalar_select %p143, %s144, %s145
      %p149 = pneg %p143
      %p150 = scmp.eq.s32.totalorder %s22, 1
      %p151 = por %p149, %p150
      %p152 = scmp.ne.s32.totalorder %s144, %s147
      %p153 = scmp.eq.s32.totalorder %s22, 0
      %p154 = por %p152, %p153
      %p155 = scmp.ne.s32.totalorder %s144, %s147
      %p156 = scmp.eq.s32.totalorder %s27, 1
      %p157 = por %p155, %p156
      %p158 = scmp.ne.s32.totalorder %s147, %s148
      %p159 = scmp.eq.s32.totalorder %s27, 0
      %p160 = por %p158, %p159
      %p161 = scmp.ne.s32.totalorder %s147, %s148
      %p162 = scmp.eq.s32.totalorder %s28, 1
      %p163 = por %p161, %p162
      %p165 = scmp.ne.s32.totalorder %s148, %s164
      %p166 = scmp.eq.s32.totalorder %s28, 0
      %p167 = por %p165, %p166
      %s168 = ssub.s32 %s29, %s41
      %s169 = ssub.s32 %s30, %s37
      %s170 = sor.u32 %s168, %s169
      %p171 = scmp.eq.s32.totalorder %s170, 0
      %s173 = sadd.s32 %s172, 1
      %s174 = scalar_select %p171, %s172, %s173
      %p177 = pneg %p171
      %p178 = scmp.eq.s32.totalorder %s22, 1
      %p179 = por %p177, %p178
      %p180 = scmp.ne.s32.totalorder %s172, %s175
      %p181 = scmp.eq.s32.totalorder %s22, 0
      %p182 = por %p180, %p181
      %p183 = scmp.ne.s32.totalorder %s172, %s175
      %p184 = scmp.eq.s32.totalorder %s27, 1
      %p185 = por %p183, %p184
      %p186 = scmp.ne.s32.totalorder %s175, %s176
      %p187 = scmp.eq.s32.totalorder %s27, 0
      %p188 = por %p186, %p187
      %p189 = scmp.ne.s32.totalorder %s175, %s176
      %p190 = scmp.eq.s32.totalorder %s28, 1
      %p191 = por %p189, %p190
      %p193 = scmp.ne.s32.totalorder %s176, %s192
      %p194 = scmp.eq.s32.totalorder %s28, 0
      %p195 = por %p193, %p194
      %p196 = scmp.le.s32.totalorder 1, %s22
      %p197 = scmp.lt.s32.totalorder %s22, 3
      %p198 = pnand %p196, %p197
      %p199 = pneg %p198
      // Predicated region
      $region9: #{tpu_custom_call.1} parent=5 // pred_check
        _
      $region10: #{tpu_custom_call.1} parent=5 // pred_check_branch
        %201 = sbr.rel (%p198) target = $region12
      $region11: #{tpu_custom_call.1} parent=5 // pred_region
        %s202 = ssub.s32 %s22, 1
        // Predicated region
        $region13: #{tpu_custom_call.1} parent=11 // pred_check
          %p203 = pneg %p83
        $region14: #{tpu_custom_call.1} parent=11 // pred_check_branch
          %205 = sbr.rel (%p203) target = $region16
        $region15: #{tpu_custom_call.1} parent=11 // pred_region
          %s207 = ssub.s32 12288, 12288
          %208 = vsyncadd [#allocation6], %s207
          %s209 = sshll.u32 [#allocation5], 4
          %s210 = int_to_ptr.vmem [resolvable:$true] %s209
          %215 = dma.hbm_to_vmem [thread:$0]  %s1, 12288, %s210, [#allocation6], 384, 384, 24
        $region16: #{tpu_custom_call.1} parent=11 // pred_fallthru
          _
        // Predicated region
        $region17: #{tpu_custom_call.1} parent=11 // pred_check
          %p216 = pneg %p104
        $region18: #{tpu_custom_call.1} parent=11 // pred_check_branch
          %218 = sbr.rel (%p216) target = $region20
        $region19: #{tpu_custom_call.1} parent=11 // pred_region
          %s220 = ssub.s32 96, 96
          %221 = vsyncadd [#allocation6], %s220
          %s223 = sshll.u32 [#allocation7], 4
          %s224 = int_to_ptr.vmem [resolvable:$true] %s223
          %226 = dma.hbm_to_vmem [thread:$0]  %s2, 96, %s224, [#allocation6]
        $region20: #{tpu_custom_call.1} parent=11 // pred_fallthru
          _
      $region12: #{tpu_custom_call.1} parent=5 // pred_fallthru
        _
      %p227 = scmp.lt.s32.totalorder %s22, 2
      // Predicated region
      $region21: #{tpu_custom_call.1} parent=5 // pred_check
        %p228 = pneg %p227
      $region22: #{tpu_custom_call.1} parent=5 // pred_check_branch
        %230 = sbr.rel (%p228) target = $region24
      $region23: #{tpu_custom_call.1} parent=5 // pred_region
        // Predicated region
        $region25: #{tpu_custom_call.1} parent=23 // pred_check
          %p231 = pneg %p56
        $region26: #{tpu_custom_call.1} parent=23 // pred_check_branch
          %233 = sbr.rel (%p231) target = $region28
        $region27: #{tpu_custom_call.1} parent=23 // pred_region
          %s234 = sand.u32 %s46, 1
          %s235 = scalar_lea.sflag [#allocation3], %s234
          %s236 = sand.u32 %s46, 1
          %s237 = smul.addr %s236, 256
          %s238 = scalar_lea.vmem [#allocation2], %s237
          %s239 = smul.u32 16, %s30
          %s241 = ssub.s32 4096, 4096
          %242 = vsyncadd %s235, %s241
          %s243 = smul.addr %s239, 2
          %s244 = smul.addr %s29, 32
          %s245 = sadd.s32 %s243, %s244
          %s246 = smul.addr %s245, 128
          %s247 = scalar_lea.hbm %s0, %s246
          %s248 = sshll.u32 %s238, 4
          %s249 = int_to_ptr.vmem [resolvable:$true] %s248
          %254 = dma.hbm_to_vmem [thread:$0]  %s247, 4096, %s249, %s235, 256, 256, 16
        $region28: #{tpu_custom_call.1} parent=23 // pred_fallthru
          _
      $region24: #{tpu_custom_call.1} parent=5 // pred_fallthru
        _
      %p255 = scmp.le.s32.totalorder 1, %s22
      %p256 = scmp.lt.s32.totalorder %s22, 3
      %p257 = pnand %p255, %p256
      %p258 = pneg %p257
      // Predicated region
      $region29: #{tpu_custom_call.1} parent=5 // pred_check
        _
      $region30: #{tpu_custom_call.1} parent=5 // pred_check_branch
        %260 = sbr.rel (%p257) target = $region32
      $region31: #{tpu_custom_call.1} parent=5 // pred_region
        %s261 = ssub.s32 %s22, 1
        %s262 = sand.u32 %s49, 1
        %s263 = scalar_lea.sflag [#allocation3], %s262
        %s264 = sand.u32 %s49, 1
        %s265 = smul.addr %s264, 256
        %s266 = scalar_lea.vmem [#allocation2], %s265
        // Predicated region
        $region33: #{tpu_custom_call.1} parent=31 // pred_check
          %p267 = pneg %p62
        $region34: #{tpu_custom_call.1} parent=31 // pred_check_branch
          %269 = sbr.rel (%p267) target = $region36
        $region35: #{tpu_custom_call.1} parent=31 // pred_region
          %270 = dma.done %s263, 4096
        $region36: #{tpu_custom_call.1} parent=31 // pred_fallthru
          _
        // Predicated region
        $region37: #{tpu_custom_call.1} parent=31 // pred_check
          %p271 = pneg %p83
        $region38: #{tpu_custom_call.1} parent=31 // pred_check_branch
          %273 = sbr.rel (%p271) target = $region40
        $region39: #{tpu_custom_call.1} parent=31 // pred_region
          %274 = dma.done [#allocation6], 12288
        $region40: #{tpu_custom_call.1} parent=31 // pred_fallthru
          _
        // Predicated region
        $region41: #{tpu_custom_call.1} parent=31 // pred_check
          %p275 = pneg %p104
        $region42: #{tpu_custom_call.1} parent=31 // pred_check_branch
          %277 = sbr.rel (%p275) target = $region44
        $region43: #{tpu_custom_call.1} parent=31 // pred_region
          %278 = dma.done [#allocation6], 96
        $region44: #{tpu_custom_call.1} parent=31 // pred_fallthru
          _
        %s279 = sand.u32 %s49, 1
        %s280 = scalar_lea.sflag [#allocation3], %s279
        %s281 = sand.u32 %s49, 1
        %s282 = smul.addr %s281, 256
        %s283 = scalar_lea.vmem [#allocation2], %s282
        %p284 = pneg %p62
        %p285 = pneg %p59
        %p286 = pneg %p83
        %p287 = pneg %p80
        %p288 = pneg %p104
        %p289 = pneg %p101
        %p290 = pneg %p132
        %p291 = pneg %p129
        %s292 = sand.u32 %s119, 1
        %s293 = scalar_lea.sflag [#allocation4], %s292
        %s294 = sand.u32 %s119, 1
        %s295 = smul.addr %s294, 128
        %s296 = scalar_lea.vmem [#allocation8], %s295
        %p297 = pneg %p160
        %p298 = pneg %p157
        %s299 = sand.u32 %s27, 1
        %s300 = scalar_lea.sflag [#allocation10], %s299
        %s301 = sand.u32 %s147, 1
        %s302 = smul.addr %s301, 128
        %s303 = scalar_lea.vmem [#allocation9], %s302
        %p304 = pneg %p188
        %p305 = pneg %p185
        %s306 = sand.u32 %s27, 1
        %s307 = scalar_lea.sflag [#allocation10], %s306
        %s308 = sand.u32 %s175, 1
        %s309 = smul.addr %s308, 128
        %s310 = scalar_lea.vmem [#allocation11], %s309
        %s311 = smul.u32 16, %s32
        %s312 = smul.u32 16, %s32
        %s313 = smul.u32 16, %s32
        %s314 = smul.u32 16, %s32
        %v315 = vld [vmem:[%s266] sm:$0xff]
        %v316 = vld [vmem:[%s266 + $0x8] sm:$0xff]
        %v317 = vld [vmem:[%s266 + $0x10] sm:$0xff]
        %v318 = vld [vmem:[%s266 + $0x18] sm:$0xff]
        %v319 = vld [vmem:[%s266 + $0x20] sm:$0xff]
        %v320 = vld [vmem:[%s266 + $0x28] sm:$0xff]
        %v321 = vld [vmem:[%s266 + $0x30] sm:$0xff]
        %v322 = vld [vmem:[%s266 + $0x38] sm:$0xff]
        %v323 = vld [vmem:[%s266 + $0x40] sm:$0xff]
        %v324 = vld [vmem:[%s266 + $0x48] sm:$0xff]
        %v325 = vld [vmem:[%s266 + $0x50] sm:$0xff]
        %v326 = vld [vmem:[%s266 + $0x58] sm:$0xff]
        %v327 = vld [vmem:[%s266 + $0x60] sm:$0xff]
        %v328 = vld [vmem:[%s266 + $0x68] sm:$0xff]
        %v329 = vld [vmem:[%s266 + $0x70] sm:$0xff]
        %v330 = vld [vmem:[%s266 + $0x78] sm:$0xff]
        %v331 = vld [vmem:[%s266 + $0x80] sm:$0xff]
        %v332 = vld [vmem:[%s266 + $0x88] sm:$0xff]
        %v333 = vld [vmem:[%s266 + $0x90] sm:$0xff]
        %v334 = vld [vmem:[%s266 + $0x98] sm:$0xff]
        %v335 = vld [vmem:[%s266 + $0xa0] sm:$0xff]
        %v336 = vld [vmem:[%s266 + $0xa8] sm:$0xff]
        %v337 = vld [vmem:[%s266 + $0xb0] sm:$0xff]
        %v338 = vld [vmem:[%s266 + $0xb8] sm:$0xff]
        %v339 = vld [vmem:[%s266 + $0xc0] sm:$0xff]
        %v340 = vld [vmem:[%s266 + $0xc8] sm:$0xff]
        %v341 = vld [vmem:[%s266 + $0xd0] sm:$0xff]
        %v342 = vld [vmem:[%s266 + $0xd8] sm:$0xff]
        %v343 = vld [vmem:[%s266 + $0xe0] sm:$0xff]
        %v344 = vld [vmem:[%s266 + $0xe8] sm:$0xff]
        %v345 = vld [vmem:[%s266 + $0xf0] sm:$0xff]
        %v346 = vld [vmem:[%s266 + $0xf8] sm:$0xff]
        %v347 = vpack.c.bf16 %v317, %v315
        %v348 = vpack.c.bf16 %v318, %v316
        %v349 = vpack.c.bf16 %v321, %v319
        %v350 = vpack.c.bf16 %v322, %v320
        %v351 = vpack.c.bf16 %v325, %v323
        %v352 = vpack.c.bf16 %v326, %v324
        %v353 = vpack.c.bf16 %v329, %v327
        %v354 = vpack.c.bf16 %v330, %v328
        %v355 = vpack.c.bf16 %v333, %v331
        %v356 = vpack.c.bf16 %v334, %v332
        %v357 = vpack.c.bf16 %v337, %v335
        %v358 = vpack.c.bf16 %v338, %v336
        %v359 = vpack.c.bf16 %v341, %v339
        %v360 = vpack.c.bf16 %v342, %v340
        %v361 = vpack.c.bf16 %v345, %v343
        %v362 = vpack.c.bf16 %v346, %v344
        %v363 = vld [vmem:[#allocation5] sm:$0xff]
        %v364 = vld [vmem:[#allocation5 + $0x8] sm:$0xff]
        %v365 = vld [vmem:[#allocation5 + $0x10] sm:$0xff]
        %v366 = vld [vmem:[#allocation5 + $0x18] sm:$0xff]
        %v367 = vld [vmem:[#allocation5 + $0x20] sm:$0xff]
        %v368 = vld [vmem:[#allocation5 + $0x28] sm:$0xff]
        %v369 = vld [vmem:[#allocation5 + $0x30] sm:$0xff]
        %v370 = vld [vmem:[#allocation5 + $0x38] sm:$0xff]
        %v371 = vld [vmem:[#allocation5 + $0x40] sm:$0xff]
        %v372 = vld [vmem:[#allocation5 + $0x48] sm:$0xff]
        %v373 = vld [vmem:[#allocation5 + $0x50] sm:$0xff]
        %v374 = vld [vmem:[#allocation5 + $0x58] sm:$0xff]
        %v375 = vld [vmem:[#allocation5 + $0x60] sm:$0xff]
        %v376 = vld [vmem:[#allocation5 + $0x68] sm:$0xff]
        %v377 = vld [vmem:[#allocation5 + $0x70] sm:$0xff]
        %v378 = vld [vmem:[#allocation5 + $0x78] sm:$0xff]
        %v379 = vld [vmem:[#allocation5 + $0x80] sm:$0xff]
        %v380 = vld [vmem:[#allocation5 + $0x88] sm:$0xff]
        %v381 = vld [vmem:[#allocation5 + $0x90] sm:$0xff]
        %v382 = vld [vmem:[#allocation5 + $0x98] sm:$0xff]
        %v383 = vld [vmem:[#allocation5 + $0xa0] sm:$0xff]
        %v384 = vld [vmem:[#allocation5 + $0xa8] sm:$0xff]
        %v385 = vld [vmem:[#allocation5 + $0xb0] sm:$0xff]
        %v386 = vld [vmem:[#allocation5 + $0xb8] sm:$0xff]
        %v387 = vld [vmem:[#allocation5 + $0xc0] sm:$0xff]
        %v388 = vld [vmem:[#allocation5 + $0xc8] sm:$0xff]
        %v389 = vld [vmem:[#allocation5 + $0xd0] sm:$0xff]
        %v390 = vld [vmem:[#allocation5 + $0xd8] sm:$0xff]
        %v391 = vld [vmem:[#allocation5 + $0xe0] sm:$0xff]
        %v392 = vld [vmem:[#allocation5 + $0xe8] sm:$0xff]
        %v393 = vld [vmem:[#allocation5 + $0xf0] sm:$0xff]
        %v394 = vld [vmem:[#allocation5 + $0xf8] sm:$0xff]
        %v395 = vld [vmem:[#allocation5 + $0x100] sm:$0xff]
        %v396 = vld [vmem:[#allocation5 + $0x108] sm:$0xff]
        %v397 = vld [vmem:[#allocation5 + $0x110] sm:$0xff]
        %v398 = vld [vmem:[#allocation5 + $0x118] sm:$0xff]
        %v399 = vld [vmem:[#allocation5 + $0x120] sm:$0xff]
        %v400 = vld [vmem:[#allocation5 + $0x128] sm:$0xff]
        %v401 = vld [vmem:[#allocation5 + $0x130] sm:$0xff]
        %v402 = vld [vmem:[#allocation5 + $0x138] sm:$0xff]
        %v403 = vld [vmem:[#allocation5 + $0x140] sm:$0xff]
        %v404 = vld [vmem:[#allocation5 + $0x148] sm:$0xff]
        %v405 = vld [vmem:[#allocation5 + $0x150] sm:$0xff]
        %v406 = vld [vmem:[#allocation5 + $0x158] sm:$0xff]
        %v407 = vld [vmem:[#allocation5 + $0x160] sm:$0xff]
        %v408 = vld [vmem:[#allocation5 + $0x168] sm:$0xff]
        %v409 = vld [vmem:[#allocation5 + $0x170] sm:$0xff]
        %v410 = vld [vmem:[#allocation5 + $0x178] sm:$0xff]
        %v411 = vld [vmem:[#allocation5 + $0x180] sm:$0xff]
        %v412 = vld [vmem:[#allocation5 + $0x188] sm:$0xff]
        %v413 = vld [vmem:[#allocation5 + $0x190] sm:$0xff]
        %v414 = vld [vmem:[#allocation5 + $0x198] sm:$0xff]
        %v415 = vld [vmem:[#allocation5 + $0x1a0] sm:$0xff]
        %v416 = vld [vmem:[#allocation5 + $0x1a8] sm:$0xff]
        %v417 = vld [vmem:[#allocation5 + $0x1b0] sm:$0xff]
        %v418 = vld [vmem:[#allocation5 + $0x1b8] sm:$0xff]
        %v419 = vld [vmem:[#allocation5 + $0x1c0] sm:$0xff]
        %v420 = vld [vmem:[#allocation5 + $0x1c8] sm:$0xff]
        %v421 = vld [vmem:[#allocation5 + $0x1d0] sm:$0xff]
        %v422 = vld [vmem:[#allocation5 + $0x1d8] sm:$0xff]
        %v423 = vld [vmem:[#allocation5 + $0x1e0] sm:$0xff]
        %v424 = vld [vmem:[#allocation5 + $0x1e8] sm:$0xff]
        %v425 = vld [vmem:[#allocation5 + $0x1f0] sm:$0xff]
        %v426 = vld [vmem:[#allocation5 + $0x1f8] sm:$0xff]
        %v427 = vld [vmem:[#allocation5 + $0x200] sm:$0xff]
        %v428 = vld [vmem:[#allocation5 + $0x208] sm:$0xff]
        %v429 = vld [vmem:[#allocation5 + $0x210] sm:$0xff]
        %v430 = vld [vmem:[#allocation5 + $0x218] sm:$0xff]
        %v431 = vld [vmem:[#allocation5 + $0x220] sm:$0xff]
        %v432 = vld [vmem:[#allocation5 + $0x228] sm:$0xff]
        %v433 = vld [vmem:[#allocation5 + $0x230] sm:$0xff]
        %v434 = vld [vmem:[#allocation5 + $0x238] sm:$0xff]
        %v435 = vld [vmem:[#allocation5 + $0x240] sm:$0xff]
        %v436 = vld [vmem:[#allocation5 + $0x248] sm:$0xff]
        %v437 = vld [vmem:[#allocation5 + $0x250] sm:$0xff]
        %v438 = vld [vmem:[#allocation5 + $0x258] sm:$0xff]
        %v439 = vld [vmem:[#allocation5 + $0x260] sm:$0xff]
        %v440 = vld [vmem:[#allocation5 + $0x268] sm:$0xff]
        %v441 = vld [vmem:[#allocation5 + $0x270] sm:$0xff]
        %v442 = vld [vmem:[#allocation5 + $0x278] sm:$0xff]
        %v443 = vld [vmem:[#allocation5 + $0x280] sm:$0xff]
        %v444 = vld [vmem:[#allocation5 + $0x288] sm:$0xff]
        %v445 = vld [vmem:[#allocation5 + $0x290] sm:$0xff]
        %v446 = vld [vmem:[#allocation5 + $0x298] sm:$0xff]
        %v447 = vld [vmem:[#allocation5 + $0x2a0] sm:$0xff]
        %v448 = vld [vmem:[#allocation5 + $0x2a8] sm:$0xff]
        %v449 = vld [vmem:[#allocation5 + $0x2b0] sm:$0xff]
        %v450 = vld [vmem:[#allocation5 + $0x2b8] sm:$0xff]
        %v451 = vld [vmem:[#allocation5 + $0x2c0] sm:$0xff]
        %v452 = vld [vmem:[#allocation5 + $0x2c8] sm:$0xff]
        %v453 = vld [vmem:[#allocation5 + $0x2d0] sm:$0xff]
        %v454 = vld [vmem:[#allocation5 + $0x2d8] sm:$0xff]
        %v455 = vld [vmem:[#allocation5 + $0x2e0] sm:$0xff]
        %v456 = vld [vmem:[#allocation5 + $0x2e8] sm:$0xff]
        %v457 = vld [vmem:[#allocation5 + $0x2f0] sm:$0xff]
        %v458 = vld [vmem:[#allocation5 + $0x2f8] sm:$0xff]
        %v459 = vld [vmem:[#allocation7] sm:$0x3f]
        %v461 = vlaneseq
        %v462 = vshrl.u32 %v461, 7
        %v463 = vsub.s32 0, %v462
        %v464 = vrot.slane %v459, %v463
        %v465 = vlaneseq
        %v466 = vshrl.u32 %v465, 7
        %v467 = vsub.s32 1, %v466
        %v468 = vrot.slane %v459, %v467
        %v469 = vlaneseq
        %v470 = vshrl.u32 %v469, 7
        %v471 = vsub.s32 2, %v470
        %v472 = vrot.slane %v459, %v471
        %v473 = vlaneseq
        %v474 = vshrl.u32 %v473, 7
        %v475 = vsub.s32 3, %v474
        %v476 = vrot.slane %v459, %v475
        %v477 = vlaneseq
        %v478 = vshrl.u32 %v477, 7
        %v479 = vsub.s32 4, %v478
        %v480 = vrot.slane %v459, %v479
        %v481 = vlaneseq
        %v482 = vshrl.u32 %v481, 7
        %v483 = vsub.s32 5, %v482
        %v484 = vrot.slane %v459, %v483
        %v587 = vunpack.c.l.b16 %v363
        %v588 = vunpack.c.h.b16 %v363
        %v589 = vunpack.c.l.b16 %v364
        %v590 = vunpack.c.h.b16 %v364
        %v591 = vunpack.c.l.b16 %v365
        %v592 = vunpack.c.h.b16 %v365
        %v593 = vunpack.c.l.b16 %v366
        %v594 = vunpack.c.h.b16 %v366
        %v595 = vunpack.c.l.b16 %v367
        %v596 = vunpack.c.h.b16 %v367
        %v597 = vunpack.c.l.b16 %v368
        %v598 = vunpack.c.h.b16 %v368
        %v599 = vunpack.c.l.b16 %v369
        %v600 = vunpack.c.h.b16 %v369
        %v601 = vunpack.c.l.b16 %v370
        %v602 = vunpack.c.h.b16 %v370
        %v603 = vunpack.c.l.b16 %v371
        %v604 = vunpack.c.h.b16 %v371
        %v605 = vunpack.c.l.b16 %v372
        %v606 = vunpack.c.h.b16 %v372
        %v607 = vunpack.c.l.b16 %v373
        %v608 = vunpack.c.h.b16 %v373
        %v609 = vunpack.c.l.b16 %v374
        %v610 = vunpack.c.h.b16 %v374
        %v611 = vunpack.c.l.b16 %v375
        %v612 = vunpack.c.h.b16 %v375
        %v613 = vunpack.c.l.b16 %v376
        %v614 = vunpack.c.h.b16 %v376
        %v615 = vunpack.c.l.b16 %v377
        %v616 = vunpack.c.h.b16 %v377
        %v617 = vunpack.c.l.b16 %v378
        %v618 = vunpack.c.h.b16 %v378
        %v619 = vunpack.c.l.b16 %v379
        %v620 = vunpack.c.h.b16 %v379
        %v621 = vunpack.c.l.b16 %v380
        %v622 = vunpack.c.h.b16 %v380
        %v623 = vunpack.c.l.b16 %v381
        %v624 = vunpack.c.h.b16 %v381
        %v625 = vunpack.c.l.b16 %v382
        %v626 = vunpack.c.h.b16 %v382
        %v627 = vunpack.c.l.b16 %v383
        %v628 = vunpack.c.h.b16 %v383
        %v629 = vunpack.c.l.b16 %v384
        %v630 = vunpack.c.h.b16 %v384
        %v631 = vunpack.c.l.b16 %v385
        %v632 = vunpack.c.h.b16 %v385
        %v633 = vunpack.c.l.b16 %v386
        %v634 = vunpack.c.h.b16 %v386
        %v635 = vunpack.c.l.b16 %v387
        %v636 = vunpack.c.h.b16 %v387
        %v637 = vunpack.c.l.b16 %v388
        %v638 = vunpack.c.h.b16 %v388
        %v639 = vunpack.c.l.b16 %v389
        %v640 = vunpack.c.h.b16 %v389
        %v641 = vunpack.c.l.b16 %v390
        %v642 = vunpack.c.h.b16 %v390
        %v643 = vunpack.c.l.b16 %v391
        %v644 = vunpack.c.h.b16 %v391
        %v645 = vunpack.c.l.b16 %v392
        %v646 = vunpack.c.h.b16 %v392
        %v647 = vunpack.c.l.b16 %v393
        %v648 = vunpack.c.h.b16 %v393
        %v649 = vunpack.c.l.b16 %v394
        %v650 = vunpack.c.h.b16 %v394
        %v651 = vunpack.c.l.b16 %v395
        %v652 = vunpack.c.h.b16 %v395
        %v653 = vunpack.c.l.b16 %v396
        %v654 = vunpack.c.h.b16 %v396
        %v655 = vunpack.c.l.b16 %v397
        %v656 = vunpack.c.h.b16 %v397
        %v657 = vunpack.c.l.b16 %v398
        %v658 = vunpack.c.h.b16 %v398
        %v659 = vunpack.c.l.b16 %v399
        %v660 = vunpack.c.h.b16 %v399
        %v661 = vunpack.c.l.b16 %v400
        %v662 = vunpack.c.h.b16 %v400
        %v663 = vunpack.c.l.b16 %v401
        %v664 = vunpack.c.h.b16 %v401
        %v665 = vunpack.c.l.b16 %v402
        %v666 = vunpack.c.h.b16 %v402
        %v667 = vunpack.c.l.b16 %v403
        %v668 = vunpack.c.h.b16 %v403
        %v669 = vunpack.c.l.b16 %v404
        %v670 = vunpack.c.h.b16 %v404
        %v671 = vunpack.c.l.b16 %v405
        %v672 = vunpack.c.h.b16 %v405
        %v673 = vunpack.c.l.b16 %v406
        %v674 = vunpack.c.h.b16 %v406
        %v675 = vunpack.c.l.b16 %v407
        %v676 = vunpack.c.h.b16 %v407
        %v677 = vunpack.c.l.b16 %v408
        %v678 = vunpack.c.h.b16 %v408
        %v679 = vunpack.c.l.b16 %v409
        %v680 = vunpack.c.h.b16 %v409
        %v681 = vunpack.c.l.b16 %v410
        %v682 = vunpack.c.h.b16 %v410
        %v683 = vunpack.c.l.b16 %v411
        %v684 = vunpack.c.h.b16 %v411
        %v685 = vunpack.c.l.b16 %v412
        %v686 = vunpack.c.h.b16 %v412
        %v687 = vunpack.c.l.b16 %v413
        %v688 = vunpack.c.h.b16 %v413
        %v689 = vunpack.c.l.b16 %v414
        %v690 = vunpack.c.h.b16 %v414
        %v691 = vunpack.c.l.b16 %v415
        %v692 = vunpack.c.h.b16 %v415
        %v693 = vunpack.c.l.b16 %v416
        %v694 = vunpack.c.h.b16 %v416
        %v695 = vunpack.c.l.b16 %v417
        %v696 = vunpack.c.h.b16 %v417
        %v697 = vunpack.c.l.b16 %v418
        %v698 = vunpack.c.h.b16 %v418
        %v699 = vunpack.c.l.b16 %v419
        %v700 = vunpack.c.h.b16 %v419
        %v701 = vunpack.c.l.b16 %v420
        %v702 = vunpack.c.h.b16 %v420
        %v703 = vunpack.c.l.b16 %v421
        %v704 = vunpack.c.h.b16 %v421
        %v705 = vunpack.c.l.b16 %v422
        %v706 = vunpack.c.h.b16 %v422
        %v707 = vunpack.c.l.b16 %v423
        %v708 = vunpack.c.h.b16 %v423
        %v709 = vunpack.c.l.b16 %v424
        %v710 = vunpack.c.h.b16 %v424
        %v711 = vunpack.c.l.b16 %v425
        %v712 = vunpack.c.h.b16 %v425
        %v713 = vunpack.c.l.b16 %v426
        %v714 = vunpack.c.h.b16 %v426
        %v715 = vunpack.c.l.b16 %v427
        %v716 = vunpack.c.h.b16 %v427
        %v717 = vunpack.c.l.b16 %v428
        %v718 = vunpack.c.h.b16 %v428
        %v719 = vunpack.c.l.b16 %v429
        %v720 = vunpack.c.h.b16 %v429
        %v721 = vunpack.c.l.b16 %v430
        %v722 = vunpack.c.h.b16 %v430
        %v723 = vunpack.c.l.b16 %v431
        %v724 = vunpack.c.h.b16 %v431
        %v725 = vunpack.c.l.b16 %v432
        %v726 = vunpack.c.h.b16 %v432
        %v727 = vunpack.c.l.b16 %v433
        %v728 = vunpack.c.h.b16 %v433
        %v729 = vunpack.c.l.b16 %v434
        %v730 = vunpack.c.h.b16 %v434
        %v731 = vunpack.c.l.b16 %v435
        %v732 = vunpack.c.h.b16 %v435
        %v733 = vunpack.c.l.b16 %v436
        %v734 = vunpack.c.h.b16 %v436
        %v735 = vunpack.c.l.b16 %v437
        %v736 = vunpack.c.h.b16 %v437
        %v737 = vunpack.c.l.b16 %v438
        %v738 = vunpack.c.h.b16 %v438
        %v739 = vunpack.c.l.b16 %v439
        %v740 = vunpack.c.h.b16 %v439
        %v741 = vunpack.c.l.b16 %v440
        %v742 = vunpack.c.h.b16 %v440
        %v743 = vunpack.c.l.b16 %v441
        %v744 = vunpack.c.h.b16 %v441
        %v745 = vunpack.c.l.b16 %v442
        %v746 = vunpack.c.h.b16 %v442
        %v747 = vunpack.c.l.b16 %v443
        %v748 = vunpack.c.h.b16 %v443
        %v749 = vunpack.c.l.b16 %v444
        %v750 = vunpack.c.h.b16 %v444
        %v751 = vunpack.c.l.b16 %v445
        %v752 = vunpack.c.h.b16 %v445
        %v753 = vunpack.c.l.b16 %v446
        %v754 = vunpack.c.h.b16 %v446
        %v755 = vunpack.c.l.b16 %v447
        %v756 = vunpack.c.h.b16 %v447
        %v757 = vunpack.c.l.b16 %v448
        %v758 = vunpack.c.h.b16 %v448
        %v759 = vunpack.c.l.b16 %v449
        %v760 = vunpack.c.h.b16 %v449
        %v761 = vunpack.c.l.b16 %v450
        %v762 = vunpack.c.h.b16 %v450
        %v763 = vunpack.c.l.b16 %v451
        %v764 = vunpack.c.h.b16 %v451
        %v765 = vunpack.c.l.b16 %v452
        %v766 = vunpack.c.h.b16 %v452
        %v767 = vunpack.c.l.b16 %v453
        %v768 = vunpack.c.h.b16 %v453
        %v769 = vunpack.c.l.b16 %v454
        %v770 = vunpack.c.h.b16 %v454
        %v771 = vunpack.c.l.b16 %v455
        %v772 = vunpack.c.h.b16 %v455
        %v773 = vunpack.c.l.b16 %v456
        %v774 = vunpack.c.h.b16 %v456
        %v775 = vunpack.c.l.b16 %v457
        %v776 = vunpack.c.h.b16 %v457
        %v777 = vunpack.c.l.b16 %v458
        %v778 = vunpack.c.h.b16 %v458
        %v779 = vpack.c.b16 %v593, %v587
        %v780 = vpack.c.b16 %v594, %v588
        %v781 = vpack.c.b16 %v595, %v589
        %v782 = vpack.c.b16 %v596, %v590
        %v783 = vpack.c.b16 %v597, %v591
        %v784 = vpack.c.b16 %v598, %v592
        %v785 = vpack.c.b16 %v605, %v599
        %v786 = vpack.c.b16 %v606, %v600
        %v787 = vpack.c.b16 %v607, %v601
        %v788 = vpack.c.b16 %v608, %v602
        %v789 = vpack.c.b16 %v609, %v603
        %v790 = vpack.c.b16 %v610, %v604
        %v791 = vpack.c.b16 %v617, %v611
        %v792 = vpack.c.b16 %v618, %v612
        %v793 = vpack.c.b16 %v619, %v613
        %v794 = vpack.c.b16 %v620, %v614
        %v795 = vpack.c.b16 %v621, %v615
        %v796 = vpack.c.b16 %v622, %v616
        %v797 = vpack.c.b16 %v629, %v623
        %v798 = vpack.c.b16 %v630, %v624
        %v799 = vpack.c.b16 %v631, %v625
        %v800 = vpack.c.b16 %v632, %v626
        %v801 = vpack.c.b16 %v633, %v627
        %v802 = vpack.c.b16 %v634, %v628
        %v803 = vpack.c.b16 %v641, %v635
        %v804 = vpack.c.b16 %v642, %v636
        %v805 = vpack.c.b16 %v643, %v637
        %v806 = vpack.c.b16 %v644, %v638
        %v807 = vpack.c.b16 %v645, %v639
        %v808 = vpack.c.b16 %v646, %v640
        %v809 = vpack.c.b16 %v653, %v647
        %v810 = vpack.c.b16 %v654, %v648
        %v811 = vpack.c.b16 %v655, %v649
        %v812 = vpack.c.b16 %v656, %v650
        %v813 = vpack.c.b16 %v657, %v651
        %v814 = vpack.c.b16 %v658, %v652
        %v815 = vpack.c.b16 %v665, %v659
        %v816 = vpack.c.b16 %v666, %v660
        %v817 = vpack.c.b16 %v667, %v661
        %v818 = vpack.c.b16 %v668, %v662
        %v819 = vpack.c.b16 %v669, %v663
        %v820 = vpack.c.b16 %v670, %v664
        %v821 = vpack.c.b16 %v677, %v671
        %v822 = vpack.c.b16 %v678, %v672
        %v823 = vpack.c.b16 %v679, %v673
        %v824 = vpack.c.b16 %v680, %v674
        %v825 = vpack.c.b16 %v681, %v675
        %v826 = vpack.c.b16 %v682, %v676
        %v827 = vpack.c.b16 %v689, %v683
        %v828 = vpack.c.b16 %v690, %v684
        %v829 = vpack.c.b16 %v691, %v685
        %v830 = vpack.c.b16 %v692, %v686
        %v831 = vpack.c.b16 %v693, %v687
        %v832 = vpack.c.b16 %v694, %v688
        %v833 = vpack.c.b16 %v701, %v695
        %v834 = vpack.c.b16 %v702, %v696
        %v835 = vpack.c.b16 %v703, %v697
        %v836 = vpack.c.b16 %v704, %v698
        %v837 = vpack.c.b16 %v705, %v699
        %v838 = vpack.c.b16 %v706, %v700
        %v839 = vpack.c.b16 %v713, %v707
        %v840 = vpack.c.b16 %v714, %v708
        %v841 = vpack.c.b16 %v715, %v709
        %v842 = vpack.c.b16 %v716, %v710
        %v843 = vpack.c.b16 %v717, %v711
        %v844 = vpack.c.b16 %v718, %v712
        %v845 = vpack.c.b16 %v725, %v719
        %v846 = vpack.c.b16 %v726, %v720
        %v847 = vpack.c.b16 %v727, %v721
        %v848 = vpack.c.b16 %v728, %v722
        %v849 = vpack.c.b16 %v729, %v723
        %v850 = vpack.c.b16 %v730, %v724
        %v851 = vpack.c.b16 %v737, %v731
        %v852 = vpack.c.b16 %v738, %v732
        %v853 = vpack.c.b16 %v739, %v733
        %v854 = vpack.c.b16 %v740, %v734
        %v855 = vpack.c.b16 %v741, %v735
        %v856 = vpack.c.b16 %v742, %v736
        %v857 = vpack.c.b16 %v749, %v743
        %v858 = vpack.c.b16 %v750, %v744
        %v859 = vpack.c.b16 %v751, %v745
        %v860 = vpack.c.b16 %v752, %v746
        %v861 = vpack.c.b16 %v753, %v747
        %v862 = vpack.c.b16 %v754, %v748
        %v863 = vpack.c.b16 %v761, %v755
        %v864 = vpack.c.b16 %v762, %v756
        %v865 = vpack.c.b16 %v763, %v757
        %v866 = vpack.c.b16 %v764, %v758
        %v867 = vpack.c.b16 %v765, %v759
        %v868 = vpack.c.b16 %v766, %v760
        %v869 = vpack.c.b16 %v773, %v767
        %v870 = vpack.c.b16 %v774, %v768
        %v871 = vpack.c.b16 %v775, %v769
        %v872 = vpack.c.b16 %v776, %v770
        %v873 = vpack.c.b16 %v777, %v771
        %v874 = vpack.c.b16 %v778, %v772
        %971 = vmatprep.subr.bf16.mxu0 %v822
        %972 = vmatpush1.bf16.msra.mxu0 %v821
        %973 = vmatprep.subr.bf16.mxu0 %v816
        %974 = vmatpush1.bf16.msra.mxu0 %v815
        %975 = vmatprep.subr.bf16.mxu0 %v810
        %976 = vmatpush1.bf16.msra.mxu0 %v809
        %977 = vmatprep.subr.bf16.mxu0 %v804
        %978 = vmatpush1.bf16.msra.mxu0 %v803
        %979 = vmatprep.subr.bf16.mxu0 %v798
        %980 = vmatpush1.bf16.msra.mxu0 %v797
        %981 = vmatprep.subr.bf16.mxu0 %v792
        %982 = vmatpush1.bf16.msra.mxu0 %v791
        %983 = vmatprep.subr.bf16.mxu0 %v786
        %984 = vmatpush1.bf16.msra.mxu0 %v785
        %985 = vmatprep.subr.bf16.mxu0 %v780
        %986 = vmatpush1.bf16.msra.mxu0 %v779
        %987 = vmatprep.subr.bf16.mxu0 %v870
        %988 = vmatpush2.bf16.msra.mxu0 %v869
        %989 = vmatprep.subr.bf16.mxu0 %v864
        %990 = vmatpush2.bf16.msra.mxu0 %v863
        %991 = vmatprep.subr.bf16.mxu0 %v858
        %992 = vmatpush2.bf16.msra.mxu0 %v857
        %993 = vmatprep.subr.bf16.mxu0 %v852
        %994 = vmatpush2.bf16.msra.mxu0 %v851
        %995 = vmatprep.subr.bf16.mxu0 %v846
        %996 = vmatpush2.bf16.msra.mxu0 %v845
        %997 = vmatprep.subr.bf16.mxu0 %v840
        %998 = vmatpush2.bf16.msra.mxu0 %v839
        %999 = vmatprep.subr.bf16.mxu0 %v834
        %1000 = vmatpush2.bf16.msra.mxu0 %v833
        %1001 = vmatprep.subr.bf16.mxu0 %v828
        %1002 = vmatpush2.bf16.msra.mxu0 %v827
        %1003 = vmatprep.mubr.bf16.mxu0 %v348
        %1004 = vmatmul.mubr.bf16.gmra.mxu0 %v347
        %v1005 = vpop.f32.mrf.mxu0
        %v1006 = vadd.f32 %v464, %v1005
        %v1007 = vpop.f32.mrf.mxu0
        %v1008 = vadd.f32 %v468, %v1007
        %v1009 = vpop.f32.mrf.mxu0
        %v1010 = vadd.f32 %v464, %v1009
        %v1011 = vpop.f32.mrf.mxu0
        %v1012 = vadd.f32 %v468, %v1011
        %1013 = vmatprep.mubr.bf16.mxu0 %v350
        %1014 = vmatmul.mubr.bf16.gmra.mxu0 %v349
        %v1015 = vpop.f32.mrf.mxu0
        %v1016 = vadd.f32 %v464, %v1015
        %v1017 = vpop.f32.mrf.mxu0
        %v1018 = vadd.f32 %v468, %v1017
        %v1019 = vpop.f32.mrf.mxu0
        %v1020 = vadd.f32 %v464, %v1019
        %v1021 = vpop.f32.mrf.mxu0
        %v1022 = vadd.f32 %v468, %v1021
        %1023 = vmatprep.mubr.bf16.mxu0 %v352
        %1024 = vmatmul.mubr.bf16.gmra.mxu0 %v351
        %v1025 = vpop.f32.mrf.mxu0
        %v1026 = vadd.f32 %v464, %v1025
        %v1027 = vpop.f32.mrf.mxu0
        %v1028 = vadd.f32 %v468, %v1027
        %v1029 = vpop.f32.mrf.mxu0
        %v1030 = vadd.f32 %v464, %v1029
        %v1031 = vpop.f32.mrf.mxu0
        %v1032 = vadd.f32 %v468, %v1031
        %1033 = vmatprep.mubr.bf16.mxu0 %v354
        %1034 = vmatmul.mubr.bf16.gmra.mxu0 %v353
        %v1035 = vpop.f32.mrf.mxu0
        %v1036 = vadd.f32 %v464, %v1035
        %v1037 = vpop.f32.mrf.mxu0
        %v1038 = vadd.f32 %v468, %v1037
        %v1039 = vpop.f32.mrf.mxu0
        %v1040 = vadd.f32 %v464, %v1039
        %v1041 = vpop.f32.mrf.mxu0
        %v1042 = vadd.f32 %v468, %v1041
        %1043 = vmatprep.mubr.bf16.mxu0 %v356
        %1044 = vmatmul.mubr.bf16.gmra.mxu0 %v355
        %v1045 = vpop.f32.mrf.mxu0
        %v1046 = vadd.f32 %v464, %v1045
        %v1047 = vpop.f32.mrf.mxu0
        %v1048 = vadd.f32 %v468, %v1047
        %v1049 = vpop.f32.mrf.mxu0
        %v1050 = vadd.f32 %v464, %v1049
        %v1051 = vpop.f32.mrf.mxu0
        %v1052 = vadd.f32 %v468, %v1051
        %1053 = vmatprep.mubr.bf16.mxu0 %v358
        %1054 = vmatmul.mubr.bf16.gmra.mxu0 %v357
        %v1055 = vpop.f32.mrf.mxu0
        %v1056 = vadd.f32 %v464, %v1055
        %v1057 = vpop.f32.mrf.mxu0
        %v1058 = vadd.f32 %v468, %v1057
        %v1059 = vpop.f32.mrf.mxu0
        %v1060 = vadd.f32 %v464, %v1059
        %v1061 = vpop.f32.mrf.mxu0
        %v1062 = vadd.f32 %v468, %v1061
        %1063 = vmatprep.mubr.bf16.mxu0 %v360
        %1064 = vmatmul.mubr.bf16.gmra.mxu0 %v359
        %v1065 = vpop.f32.mrf.mxu0
        %v1066 = vadd.f32 %v464, %v1065
        %v1067 = vpop.f32.mrf.mxu0
        %v1068 = vadd.f32 %v468, %v1067
        %v1069 = vpop.f32.mrf.mxu0
        %v1070 = vadd.f32 %v464, %v1069
        %v1071 = vpop.f32.mrf.mxu0
        %v1072 = vadd.f32 %v468, %v1071
        %1073 = vmatprep.mubr.bf16.mxu0 %v362
        %1074 = vmatmul.mubr.bf16.gmra.mxu0 %v361
        %v1075 = vpop.f32.mrf.mxu0
        %v1076 = vadd.f32 %v464, %v1075
        %v1077 = vpop.f32.mrf.mxu0
        %v1078 = vadd.f32 %v468, %v1077
        %v1079 = vpop.f32.mrf.mxu0
        %v1080 = vadd.f32 %v464, %v1079
        %v1081 = vpop.f32.mrf.mxu0
        %v1082 = vadd.f32 %v468, %v1081
        %1083 = vdwg.mxu0
        %1084 = vmatprep.subr.bf16.mxu0 %v824
        %1085 = vmatpush1.bf16.msra.mxu0 %v823
        %1086 = vmatprep.subr.bf16.mxu0 %v818
        %1087 = vmatpush1.bf16.msra.mxu0 %v817
        %1088 = vmatprep.subr.bf16.mxu0 %v812
        %1089 = vmatpush1.bf16.msra.mxu0 %v811
        %1090 = vmatprep.subr.bf16.mxu0 %v806
        %1091 = vmatpush1.bf16.msra.mxu0 %v805
        %1092 = vmatprep.subr.bf16.mxu0 %v800
        %1093 = vmatpush1.bf16.msra.mxu0 %v799
        %1094 = vmatprep.subr.bf16.mxu0 %v794
        %1095 = vmatpush1.bf16.msra.mxu0 %v793
        %1096 = vmatprep.subr.bf16.mxu0 %v788
        %1097 = vmatpush1.bf16.msra.mxu0 %v787
        %1098 = vmatprep.subr.bf16.mxu0 %v782
        %1099 = vmatpush1.bf16.msra.mxu0 %v781
        %1100 = vmatprep.subr.bf16.mxu0 %v872
        %1101 = vmatpush2.bf16.msra.mxu0 %v871
        %1102 = vmatprep.subr.bf16.mxu0 %v866
        %1103 = vmatpush2.bf16.msra.mxu0 %v865
        %1104 = vmatprep.subr.bf16.mxu0 %v860
        %1105 = vmatpush2.bf16.msra.mxu0 %v859
        %1106 = vmatprep.subr.bf16.mxu0 %v854
        %1107 = vmatpush2.bf16.msra.mxu0 %v853
        %1108 = vmatprep.subr.bf16.mxu0 %v848
        %1109 = vmatpush2.bf16.msra.mxu0 %v847
        %1110 = vmatprep.subr.bf16.mxu0 %v842
        %1111 = vmatpush2.bf16.msra.mxu0 %v841
        %1112 = vmatprep.subr.bf16.mxu0 %v836
        %1113 = vmatpush2.bf16.msra.mxu0 %v835
        %1114 = vmatprep.subr.bf16.mxu0 %v830
        %1115 = vmatpush2.bf16.msra.mxu0 %v829
        %1116 = vmatprep.mubr.bf16.mxu0 %v348
        %1117 = vmatmul.mubr.bf16.gmra.mxu0 %v347
        %v1118 = vpop.f32.mrf.mxu0
        %v1119 = vadd.f32 %v472, %v1118
        %v1120 = vpop.f32.mrf.mxu0
        %v1121 = vadd.f32 %v476, %v1120
        %v1122 = vpop.f32.mrf.mxu0
        %v1123 = vadd.f32 %v472, %v1122
        %v1124 = vpop.f32.mrf.mxu0
        %v1125 = vadd.f32 %v476, %v1124
        %1126 = vmatprep.mubr.bf16.mxu0 %v350
        %1127 = vmatmul.mubr.bf16.gmra.mxu0 %v349
        %v1128 = vpop.f32.mrf.mxu0
        %v1129 = vadd.f32 %v472, %v1128
        %v1130 = vpop.f32.mrf.mxu0
        %v1131 = vadd.f32 %v476, %v1130
        %v1132 = vpop.f32.mrf.mxu0
        %v1133 = vadd.f32 %v472, %v1132
        %v1134 = vpop.f32.mrf.mxu0
        %v1135 = vadd.f32 %v476, %v1134
        %1136 = vmatprep.mubr.bf16.mxu0 %v352
        %1137 = vmatmul.mubr.bf16.gmra.mxu0 %v351
        %v1138 = vpop.f32.mrf.mxu0
        %v1139 = vadd.f32 %v472, %v1138
        %v1140 = vpop.f32.mrf.mxu0
        %v1141 = vadd.f32 %v476, %v1140
        %v1142 = vpop.f32.mrf.mxu0
        %v1143 = vadd.f32 %v472, %v1142
        %v1144 = vpop.f32.mrf.mxu0
        %v1145 = vadd.f32 %v476, %v1144
        %1146 = vmatprep.mubr.bf16.mxu0 %v354
        %1147 = vmatmul.mubr.bf16.gmra.mxu0 %v353
        %v1148 = vpop.f32.mrf.mxu0
        %v1149 = vadd.f32 %v472, %v1148
        %v1150 = vpop.f32.mrf.mxu0
        %v1151 = vadd.f32 %v476, %v1150
        %v1152 = vpop.f32.mrf.mxu0
        %v1153 = vadd.f32 %v472, %v1152
        %v1154 = vpop.f32.mrf.mxu0
        %v1155 = vadd.f32 %v476, %v1154
        %1156 = vmatprep.mubr.bf16.mxu0 %v356
        %1157 = vmatmul.mubr.bf16.gmra.mxu0 %v355
        %v1158 = vpop.f32.mrf.mxu0
        %v1159 = vadd.f32 %v472, %v1158
        %v1160 = vpop.f32.mrf.mxu0
        %v1161 = vadd.f32 %v476, %v1160
        %v1162 = vpop.f32.mrf.mxu0
        %v1163 = vadd.f32 %v472, %v1162
        %v1164 = vpop.f32.mrf.mxu0
        %v1165 = vadd.f32 %v476, %v1164
        %1166 = vmatprep.mubr.bf16.mxu0 %v358
        %1167 = vmatmul.mubr.bf16.gmra.mxu0 %v357
        %v1168 = vpop.f32.mrf.mxu0
        %v1169 = vadd.f32 %v472, %v1168
        %v1170 = vpop.f32.mrf.mxu0
        %v1171 = vadd.f32 %v476, %v1170
        %v1172 = vpop.f32.mrf.mxu0
        %v1173 = vadd.f32 %v472, %v1172
        %v1174 = vpop.f32.mrf.mxu0
        %v1175 = vadd.f32 %v476, %v1174
        %1176 = vmatprep.mubr.bf16.mxu0 %v360
        %1177 = vmatmul.mubr.bf16.gmra.mxu0 %v359
        %v1178 = vpop.f32.mrf.mxu0
        %v1179 = vadd.f32 %v472, %v1178
        %v1180 = vpop.f32.mrf.mxu0
        %v1181 = vadd.f32 %v476, %v1180
        %v1182 = vpop.f32.mrf.mxu0
        %v1183 = vadd.f32 %v472, %v1182
        %v1184 = vpop.f32.mrf.mxu0
        %v1185 = vadd.f32 %v476, %v1184
        %1186 = vmatprep.mubr.bf16.mxu0 %v362
        %1187 = vmatmul.mubr.bf16.gmra.mxu0 %v361
        %v1188 = vpop.f32.mrf.mxu0
        %v1189 = vadd.f32 %v472, %v1188
        %v1190 = vpop.f32.mrf.mxu0
        %v1191 = vadd.f32 %v476, %v1190
        %v1192 = vpop.f32.mrf.mxu0
        %v1193 = vadd.f32 %v472, %v1192
        %v1194 = vpop.f32.mrf.mxu0
        %v1195 = vadd.f32 %v476, %v1194
        %1196 = vdwg.mxu0
        %1197 = vmatprep.subr.bf16.mxu0 %v826
        %1198 = vmatpush1.bf16.msra.mxu0 %v825
        %1199 = vmatprep.subr.bf16.mxu0 %v820
        %1200 = vmatpush1.bf16.msra.mxu0 %v819
        %1201 = vmatprep.subr.bf16.mxu0 %v814
        %1202 = vmatpush1.bf16.msra.mxu0 %v813
        %1203 = vmatprep.subr.bf16.mxu0 %v808
        %1204 = vmatpush1.bf16.msra.mxu0 %v807
        %1205 = vmatprep.subr.bf16.mxu0 %v802
        %1206 = vmatpush1.bf16.msra.mxu0 %v801
        %1207 = vmatprep.subr.bf16.mxu0 %v796
        %1208 = vmatpush1.bf16.msra.mxu0 %v795
        %1209 = vmatprep.subr.bf16.mxu0 %v790
        %1210 = vmatpush1.bf16.msra.mxu0 %v789
        %1211 = vmatprep.subr.bf16.mxu0 %v784
        %1212 = vmatpush1.bf16.msra.mxu0 %v783
        %1213 = vmatprep.subr.bf16.mxu0 %v874
        %1214 = vmatpush2.bf16.msra.mxu0 %v873
        %1215 = vmatprep.subr.bf16.mxu0 %v868
        %1216 = vmatpush2.bf16.msra.mxu0 %v867
        %1217 = vmatprep.subr.bf16.mxu0 %v862
        %1218 = vmatpush2.bf16.msra.mxu0 %v861
        %1219 = vmatprep.subr.bf16.mxu0 %v856
        %1220 = vmatpush2.bf16.msra.mxu0 %v855
        %1221 = vmatprep.subr.bf16.mxu0 %v850
        %1222 = vmatpush2.bf16.msra.mxu0 %v849
        %1223 = vmatprep.subr.bf16.mxu0 %v844
        %1224 = vmatpush2.bf16.msra.mxu0 %v843
        %1225 = vmatprep.subr.bf16.mxu0 %v838
        %1226 = vmatpush2.bf16.msra.mxu0 %v837
        %1227 = vmatprep.subr.bf16.mxu0 %v832
        %1228 = vmatpush2.bf16.msra.mxu0 %v831
        %1229 = vmatprep.mubr.bf16.mxu0 %v348
        %1230 = vmatmul.mubr.bf16.gmra.mxu0 %v347
        %v1231 = vpop.f32.mrf.mxu0
        %v1232 = vadd.f32 %v480, %v1231
        %v1233 = vpop.f32.mrf.mxu0
        %v1234 = vadd.f32 %v484, %v1233
        %v1235 = vpop.f32.mrf.mxu0
        %v1236 = vadd.f32 %v480, %v1235
        %v1237 = vpop.f32.mrf.mxu0
        %v1238 = vadd.f32 %v484, %v1237
        %1239 = vmatprep.mubr.bf16.mxu0 %v350
        %1240 = vmatmul.mubr.bf16.gmra.mxu0 %v349
        %v1241 = vpop.f32.mrf.mxu0
        %v1242 = vadd.f32 %v480, %v1241
        %v1243 = vpop.f32.mrf.mxu0
        %v1244 = vadd.f32 %v484, %v1243
        %v1245 = vpop.f32.mrf.mxu0
        %v1246 = vadd.f32 %v480, %v1245
        %v1247 = vpop.f32.mrf.mxu0
        %v1248 = vadd.f32 %v484, %v1247
        %1249 = vmatprep.mubr.bf16.mxu0 %v352
        %1250 = vmatmul.mubr.bf16.gmra.mxu0 %v351
        %v1251 = vpop.f32.mrf.mxu0
        %v1252 = vadd.f32 %v480, %v1251
        %v1253 = vpop.f32.mrf.mxu0
        %v1254 = vadd.f32 %v484, %v1253
        %v1255 = vpop.f32.mrf.mxu0
        %v1256 = vadd.f32 %v480, %v1255
        %v1257 = vpop.f32.mrf.mxu0
        %v1258 = vadd.f32 %v484, %v1257
        %1259 = vmatprep.mubr.bf16.mxu0 %v354
        %1260 = vmatmul.mubr.bf16.gmra.mxu0 %v353
        %v1261 = vpop.f32.mrf.mxu0
        %v1262 = vadd.f32 %v480, %v1261
        %v1263 = vpop.f32.mrf.mxu0
        %v1264 = vadd.f32 %v484, %v1263
        %v1265 = vpop.f32.mrf.mxu0
        %v1266 = vadd.f32 %v480, %v1265
        %v1267 = vpop.f32.mrf.mxu0
        %v1268 = vadd.f32 %v484, %v1267
        %1269 = vmatprep.mubr.bf16.mxu0 %v356
        %1270 = vmatmul.mubr.bf16.gmra.mxu0 %v355
        %v1271 = vpop.f32.mrf.mxu0
        %v1272 = vadd.f32 %v480, %v1271
        %v1273 = vpop.f32.mrf.mxu0
        %v1274 = vadd.f32 %v484, %v1273
        %v1275 = vpop.f32.mrf.mxu0
        %v1276 = vadd.f32 %v480, %v1275
        %v1277 = vpop.f32.mrf.mxu0
        %v1278 = vadd.f32 %v484, %v1277
        %1279 = vmatprep.mubr.bf16.mxu0 %v358
        %1280 = vmatmul.mubr.bf16.gmra.mxu0 %v357
        %v1281 = vpop.f32.mrf.mxu0
        %v1282 = vadd.f32 %v480, %v1281
        %v1283 = vpop.f32.mrf.mxu0
        %v1284 = vadd.f32 %v484, %v1283
        %v1285 = vpop.f32.mrf.mxu0
        %v1286 = vadd.f32 %v480, %v1285
        %v1287 = vpop.f32.mrf.mxu0
        %v1288 = vadd.f32 %v484, %v1287
        %1289 = vmatprep.mubr.bf16.mxu0 %v360
        %1290 = vmatmul.mubr.bf16.gmra.mxu0 %v359
        %v1291 = vpop.f32.mrf.mxu0
        %v1292 = vadd.f32 %v480, %v1291
        %v1293 = vpop.f32.mrf.mxu0
        %v1294 = vadd.f32 %v484, %v1293
        %v1295 = vpop.f32.mrf.mxu0
        %v1296 = vadd.f32 %v480, %v1295
        %v1297 = vpop.f32.mrf.mxu0
        %v1298 = vadd.f32 %v484, %v1297
        %1299 = vmatprep.mubr.bf16.mxu0 %v362
        %1300 = vmatmul.mubr.bf16.gmra.mxu0 %v361
        %v1301 = vpop.f32.mrf.mxu0
        %v1302 = vadd.f32 %v480, %v1301
        %v1303 = vpop.f32.mrf.mxu0
        %v1304 = vadd.f32 %v484, %v1303
        %v1305 = vpop.f32.mrf.mxu0
        %v1306 = vadd.f32 %v480, %v1305
        %v1307 = vpop.f32.mrf.mxu0
        %v1308 = vadd.f32 %v484, %v1307
        %1309 = vdwg.mxu0
        %v1310 = vmul.f32 %v1006, 0.088388346
        %v1311 = vmul.f32 %v1010, 0.088388346
        %v1312 = vmul.f32 %v1016, 0.088388346
        %v1313 = vmul.f32 %v1020, 0.088388346
        %v1314 = vmul.f32 %v1026, 0.088388346
        %v1315 = vmul.f32 %v1030, 0.088388346
        %v1316 = vmul.f32 %v1036, 0.088388346
        %v1317 = vmul.f32 %v1040, 0.088388346
        %v1318 = vmul.f32 %v1046, 0.088388346
        %v1319 = vmul.f32 %v1050, 0.088388346
        %v1320 = vmul.f32 %v1056, 0.088388346
        %v1321 = vmul.f32 %v1060, 0.088388346
        %v1322 = vmul.f32 %v1066, 0.088388346
        %v1323 = vmul.f32 %v1070, 0.088388346
        %v1324 = vmul.f32 %v1076, 0.088388346
        %v1325 = vmul.f32 %v1080, 0.088388346
        %v1326 = vpack.c.bf16 %v1311, %v1310
        %v1327 = vpack.c.bf16 %v1313, %v1312
        %v1328 = vpack.c.bf16 %v1315, %v1314
        %v1329 = vpack.c.bf16 %v1317, %v1316
        %v1330 = vpack.c.bf16 %v1319, %v1318
        %v1331 = vpack.c.bf16 %v1321, %v1320
        %v1332 = vpack.c.bf16 %v1323, %v1322
        %v1333 = vpack.c.bf16 %v1325, %v1324
        %v1342 = vunpack.c.l.b16 %v1326
        %v1343 = vunpack.c.h.b16 %v1326
        %v1344 = vunpack.c.l.b16 %v1327
        %v1345 = vunpack.c.h.b16 %v1327
        %v1346 = vunpack.c.l.b16 %v1328
        %v1347 = vunpack.c.h.b16 %v1328
        %v1348 = vunpack.c.l.b16 %v1329
        %v1349 = vunpack.c.h.b16 %v1329
        %v1350 = vunpack.c.l.b16 %v1330
        %v1351 = vunpack.c.h.b16 %v1330
        %v1352 = vunpack.c.l.b16 %v1331
        %v1353 = vunpack.c.h.b16 %v1331
        %v1354 = vunpack.c.l.b16 %v1332
        %v1355 = vunpack.c.h.b16 %v1332
        %v1356 = vunpack.c.l.b16 %v1333
        %v1357 = vunpack.c.h.b16 %v1333
        %v1358 = vpack.c.b16 %v1342, %v1342
        %v1359 = vpack.c.b16 %v1343, %v1343
        %v1360 = vpack.c.b16 %v1344, %v1344
        %v1361 = vpack.c.b16 %v1345, %v1345
        %v1362 = vpack.c.b16 %v1346, %v1346
        %v1363 = vpack.c.b16 %v1347, %v1347
        %v1364 = vpack.c.b16 %v1348, %v1348
        %v1365 = vpack.c.b16 %v1349, %v1349
        %v1366 = vpack.c.b16 %v1350, %v1350
        %v1367 = vpack.c.b16 %v1351, %v1351
        %v1368 = vpack.c.b16 %v1352, %v1352
        %v1369 = vpack.c.b16 %v1353, %v1353
        %v1370 = vpack.c.b16 %v1354, %v1354
        %v1371 = vpack.c.b16 %v1355, %v1355
        %v1372 = vpack.c.b16 %v1356, %v1356
        %v1373 = vpack.c.b16 %v1357, %v1357
        %1390 = vst [vmem:[%s296] sm:$0xf] %v1358
        %1391 = vst [vmem:[%s296 + $0x4] sm:$0xf] %v1359
        %1392 = vst [vmem:[%s296 + $0x8] sm:$0xf] %v1360
        %1393 = vst [vmem:[%s296 + $0xc] sm:$0xf] %v1361
        %1394 = vst [vmem:[%s296 + $0x10] sm:$0xf] %v1362
        %1395 = vst [vmem:[%s296 + $0x14] sm:$0xf] %v1363
        %1396 = vst [vmem:[%s296 + $0x18] sm:$0xf] %v1364
        %1397 = vst [vmem:[%s296 + $0x1c] sm:$0xf] %v1365
        %1398 = vst [vmem:[%s296 + $0x20] sm:$0xf] %v1366
        %1399 = vst [vmem:[%s296 + $0x24] sm:$0xf] %v1367
        %1400 = vst [vmem:[%s296 + $0x28] sm:$0xf] %v1368
        %1401 = vst [vmem:[%s296 + $0x2c] sm:$0xf] %v1369
        %1402 = vst [vmem:[%s296 + $0x30] sm:$0xf] %v1370
        %1403 = vst [vmem:[%s296 + $0x34] sm:$0xf] %v1371
        %1404 = vst [vmem:[%s296 + $0x38] sm:$0xf] %v1372
        %1405 = vst [vmem:[%s296 + $0x3c] sm:$0xf] %v1373
        %v1406 = vpack.c.bf16 %v1123, %v1119
        %v1407 = vpack.c.bf16 %v1133, %v1129
        %v1408 = vpack.c.bf16 %v1143, %v1139
        %v1409 = vpack.c.bf16 %v1153, %v1149
        %v1410 = vpack.c.bf16 %v1163, %v1159
        %v1411 = vpack.c.bf16 %v1173, %v1169
        %v1412 = vpack.c.bf16 %v1183, %v1179
        %v1413 = vpack.c.bf16 %v1193, %v1189
        %v1422 = vunpack.c.l.b16 %v1406
        %v1423 = vunpack.c.h.b16 %v1406
        %v1424 = vunpack.c.l.b16 %v1407
        %v1425 = vunpack.c.h.b16 %v1407
        %v1426 = vunpack.c.l.b16 %v1408
        %v1427 = vunpack.c.h.b16 %v1408
        %v1428 = vunpack.c.l.b16 %v1409
        %v1429 = vunpack.c.h.b16 %v1409
        %v1430 = vunpack.c.l.b16 %v1410
        %v1431 = vunpack.c.h.b16 %v1410
        %v1432 = vunpack.c.l.b16 %v1411
        %v1433 = vunpack.c.h.b16 %v1411
        %v1434 = vunpack.c.l.b16 %v1412
        %v1435 = vunpack.c.h.b16 %v1412
        %v1436 = vunpack.c.l.b16 %v1413
        %v1437 = vunpack.c.h.b16 %v1413
        %v1438 = vpack.c.b16 %v1422, %v1422
        %v1439 = vpack.c.b16 %v1423, %v1423
        %v1440 = vpack.c.b16 %v1424, %v1424
        %v1441 = vpack.c.b16 %v1425, %v1425
        %v1442 = vpack.c.b16 %v1426, %v1426
        %v1443 = vpack.c.b16 %v1427, %v1427
        %v1444 = vpack.c.b16 %v1428, %v1428
        %v1445 = vpack.c.b16 %v1429, %v1429
        %v1446 = vpack.c.b16 %v1430, %v1430
        %v1447 = vpack.c.b16 %v1431, %v1431
        %v1448 = vpack.c.b16 %v1432, %v1432
        %v1449 = vpack.c.b16 %v1433, %v1433
        %v1450 = vpack.c.b16 %v1434, %v1434
        %v1451 = vpack.c.b16 %v1435, %v1435
        %v1452 = vpack.c.b16 %v1436, %v1436
        %v1453 = vpack.c.b16 %v1437, %v1437
        %1470 = vst [vmem:[%s303] sm:$0xf] %v1438
        %1471 = vst [vmem:[%s303 + $0x4] sm:$0xf] %v1439
        %1472 = vst [vmem:[%s303 + $0x8] sm:$0xf] %v1440
        %1473 = vst [vmem:[%s303 + $0xc] sm:$0xf] %v1441
        %1474 = vst [vmem:[%s303 + $0x10] sm:$0xf] %v1442
        %1475 = vst [vmem:[%s303 + $0x14] sm:$0xf] %v1443
        %1476 = vst [vmem:[%s303 + $0x18] sm:$0xf] %v1444
        %1477 = vst [vmem:[%s303 + $0x1c] sm:$0xf] %v1445
        %1478 = vst [vmem:[%s303 + $0x20] sm:$0xf] %v1446
        %1479 = vst [vmem:[%s303 + $0x24] sm:$0xf] %v1447
        %1480 = vst [vmem:[%s303 + $0x28] sm:$0xf] %v1448
        %1481 = vst [vmem:[%s303 + $0x2c] sm:$0xf] %v1449
        %1482 = vst [vmem:[%s303 + $0x30] sm:$0xf] %v1450
        %1483 = vst [vmem:[%s303 + $0x34] sm:$0xf] %v1451
        %1484 = vst [vmem:[%s303 + $0x38] sm:$0xf] %v1452
        %1485 = vst [vmem:[%s303 + $0x3c] sm:$0xf] %v1453
        %v1486 = vpack.c.bf16 %v1236, %v1232
        %v1487 = vpack.c.bf16 %v1246, %v1242
        %v1488 = vpack.c.bf16 %v1256, %v1252
        %v1489 = vpack.c.bf16 %v1266, %v1262
        %v1490 = vpack.c.bf16 %v1276, %v1272
        %v1491 = vpack.c.bf16 %v1286, %v1282
        %v1492 = vpack.c.bf16 %v1296, %v1292
        %v1493 = vpack.c.bf16 %v1306, %v1302
        %v1502 = vunpack.c.l.b16 %v1486
        %v1503 = vunpack.c.h.b16 %v1486
        %v1504 = vunpack.c.l.b16 %v1487
        %v1505 = vunpack.c.h.b16 %v1487
        %v1506 = vunpack.c.l.b16 %v1488
        %v1507 = vunpack.c.h.b16 %v1488
        %v1508 = vunpack.c.l.b16 %v1489
        %v1509 = vunpack.c.h.b16 %v1489
        %v1510 = vunpack.c.l.b16 %v1490
        %v1511 = vunpack.c.h.b16 %v1490
        %v1512 = vunpack.c.l.b16 %v1491
        %v1513 = vunpack.c.h.b16 %v1491
        %v1514 = vunpack.c.l.b16 %v1492
        %v1515 = vunpack.c.h.b16 %v1492
        %v1516 = vunpack.c.l.b16 %v1493
        %v1517 = vunpack.c.h.b16 %v1493
        %v1518 = vpack.c.b16 %v1502, %v1502
        %v1519 = vpack.c.b16 %v1503, %v1503
        %v1520 = vpack.c.b16 %v1504, %v1504
        %v1521 = vpack.c.b16 %v1505, %v1505
        %v1522 = vpack.c.b16 %v1506, %v1506
        %v1523 = vpack.c.b16 %v1507, %v1507
        %v1524 = vpack.c.b16 %v1508, %v1508
        %v1525 = vpack.c.b16 %v1509, %v1509
        %v1526 = vpack.c.b16 %v1510, %v1510
        %v1527 = vpack.c.b16 %v1511, %v1511
        %v1528 = vpack.c.b16 %v1512, %v1512
        %v1529 = vpack.c.b16 %v1513, %v1513
        %v1530 = vpack.c.b16 %v1514, %v1514
        %v1531 = vpack.c.b16 %v1515, %v1515
        %v1532 = vpack.c.b16 %v1516, %v1516
        %v1533 = vpack.c.b16 %v1517, %v1517
        %1550 = vst [vmem:[%s310] sm:$0xf] %v1518
        %1551 = vst [vmem:[%s310 + $0x4] sm:$0xf] %v1519
        %1552 = vst [vmem:[%s310 + $0x8] sm:$0xf] %v1520
        %1553 = vst [vmem:[%s310 + $0xc] sm:$0xf] %v1521
        %1554 = vst [vmem:[%s310 + $0x10] sm:$0xf] %v1522
        %1555 = vst [vmem:[%s310 + $0x14] sm:$0xf] %v1523
        %1556 = vst [vmem:[%s310 + $0x18] sm:$0xf] %v1524
        %1557 = vst [vmem:[%s310 + $0x1c] sm:$0xf] %v1525
        %1558 = vst [vmem:[%s310 + $0x20] sm:$0xf] %v1526
        %1559 = vst [vmem:[%s310 + $0x24] sm:$0xf] %v1527
        %1560 = vst [vmem:[%s310 + $0x28] sm:$0xf] %v1528
        %1561 = vst [vmem:[%s310 + $0x2c] sm:$0xf] %v1529
        %1562 = vst [vmem:[%s310 + $0x30] sm:$0xf] %v1530
        %1563 = vst [vmem:[%s310 + $0x34] sm:$0xf] %v1531
        %1564 = vst [vmem:[%s310 + $0x38] sm:$0xf] %v1532
        %1565 = vst [vmem:[%s310 + $0x3c] sm:$0xf] %v1533
        %v1566 = vmul.f32 %v1008, 0.088388346
        %v1567 = vmul.f32 %v1012, 0.088388346
        %v1568 = vmul.f32 %v1018, 0.088388346
        %v1569 = vmul.f32 %v1022, 0.088388346
        %v1570 = vmul.f32 %v1028, 0.088388346
        %v1571 = vmul.f32 %v1032, 0.088388346
        %v1572 = vmul.f32 %v1038, 0.088388346
        %v1573 = vmul.f32 %v1042, 0.088388346
        %v1574 = vmul.f32 %v1048, 0.088388346
        %v1575 = vmul.f32 %v1052, 0.088388346
        %v1576 = vmul.f32 %v1058, 0.088388346
        %v1577 = vmul.f32 %v1062, 0.088388346
        %v1578 = vmul.f32 %v1068, 0.088388346
        %v1579 = vmul.f32 %v1072, 0.088388346
        %v1580 = vmul.f32 %v1078, 0.088388346
        %v1581 = vmul.f32 %v1082, 0.088388346
        %v1582 = vpack.c.bf16 %v1567, %v1566
        %v1583 = vpack.c.bf16 %v1569, %v1568
        %v1584 = vpack.c.bf16 %v1571, %v1570
        %v1585 = vpack.c.bf16 %v1573, %v1572
        %v1586 = vpack.c.bf16 %v1575, %v1574
        %v1587 = vpack.c.bf16 %v1577, %v1576
        %v1588 = vpack.c.bf16 %v1579, %v1578
        %v1589 = vpack.c.bf16 %v1581, %v1580
        %v1598 = vunpack.c.l.b16 %v1582
        %v1599 = vunpack.c.h.b16 %v1582
        %v1600 = vunpack.c.l.b16 %v1583
        %v1601 = vunpack.c.h.b16 %v1583
        %v1602 = vunpack.c.l.b16 %v1584
        %v1603 = vunpack.c.h.b16 %v1584
        %v1604 = vunpack.c.l.b16 %v1585
        %v1605 = vunpack.c.h.b16 %v1585
        %v1606 = vunpack.c.l.b16 %v1586
        %v1607 = vunpack.c.h.b16 %v1586
        %v1608 = vunpack.c.l.b16 %v1587
        %v1609 = vunpack.c.h.b16 %v1587
        %v1610 = vunpack.c.l.b16 %v1588
        %v1611 = vunpack.c.h.b16 %v1588
        %v1612 = vunpack.c.l.b16 %v1589
        %v1613 = vunpack.c.h.b16 %v1589
        %v1614 = vpack.c.b16 %v1598, %v1598
        %v1615 = vpack.c.b16 %v1599, %v1599
        %v1616 = vpack.c.b16 %v1600, %v1600
        %v1617 = vpack.c.b16 %v1601, %v1601
        %v1618 = vpack.c.b16 %v1602, %v1602
        %v1619 = vpack.c.b16 %v1603, %v1603
        %v1620 = vpack.c.b16 %v1604, %v1604
        %v1621 = vpack.c.b16 %v1605, %v1605
        %v1622 = vpack.c.b16 %v1606, %v1606
        %v1623 = vpack.c.b16 %v1607, %v1607
        %v1624 = vpack.c.b16 %v1608, %v1608
        %v1625 = vpack.c.b16 %v1609, %v1609
        %v1626 = vpack.c.b16 %v1610, %v1610
        %v1627 = vpack.c.b16 %v1611, %v1611
        %v1628 = vpack.c.b16 %v1612, %v1612
        %v1629 = vpack.c.b16 %v1613, %v1613
        %s1646 = scalar_lea.vmem %s296, 64 [#allocation8]
        %1647 = vst [vmem:[%s1646] sm:$0xf] %v1614
        %1648 = vst [vmem:[%s1646 + $0x4] sm:$0xf] %v1615
        %1649 = vst [vmem:[%s1646 + $0x8] sm:$0xf] %v1616
        %1650 = vst [vmem:[%s1646 + $0xc] sm:$0xf] %v1617
        %1651 = vst [vmem:[%s1646 + $0x10] sm:$0xf] %v1618
        %1652 = vst [vmem:[%s1646 + $0x14] sm:$0xf] %v1619
        %1653 = vst [vmem:[%s1646 + $0x18] sm:$0xf] %v1620
        %1654 = vst [vmem:[%s1646 + $0x1c] sm:$0xf] %v1621
        %1655 = vst [vmem:[%s1646 + $0x20] sm:$0xf] %v1622
        %1656 = vst [vmem:[%s1646 + $0x24] sm:$0xf] %v1623
        %1657 = vst [vmem:[%s1646 + $0x28] sm:$0xf] %v1624
        %1658 = vst [vmem:[%s1646 + $0x2c] sm:$0xf] %v1625
        %1659 = vst [vmem:[%s1646 + $0x30] sm:$0xf] %v1626
        %1660 = vst [vmem:[%s1646 + $0x34] sm:$0xf] %v1627
        %1661 = vst [vmem:[%s1646 + $0x38] sm:$0xf] %v1628
        %1662 = vst [vmem:[%s1646 + $0x3c] sm:$0xf] %v1629
        %v1663 = vpack.c.bf16 %v1125, %v1121
        %v1664 = vpack.c.bf16 %v1135, %v1131
        %v1665 = vpack.c.bf16 %v1145, %v1141
        %v1666 = vpack.c.bf16 %v1155, %v1151
        %v1667 = vpack.c.bf16 %v1165, %v1161
        %v1668 = vpack.c.bf16 %v1175, %v1171
        %v1669 = vpack.c.bf16 %v1185, %v1181
        %v1670 = vpack.c.bf16 %v1195, %v1191
        %v1679 = vunpack.c.l.b16 %v1663
        %v1680 = vunpack.c.h.b16 %v1663
        %v1681 = vunpack.c.l.b16 %v1664
        %v1682 = vunpack.c.h.b16 %v1664
        %v1683 = vunpack.c.l.b16 %v1665
        %v1684 = vunpack.c.h.b16 %v1665
        %v1685 = vunpack.c.l.b16 %v1666
        %v1686 = vunpack.c.h.b16 %v1666
        %v1687 = vunpack.c.l.b16 %v1667
        %v1688 = vunpack.c.h.b16 %v1667
        %v1689 = vunpack.c.l.b16 %v1668
        %v1690 = vunpack.c.h.b16 %v1668
        %v1691 = vunpack.c.l.b16 %v1669
        %v1692 = vunpack.c.h.b16 %v1669
        %v1693 = vunpack.c.l.b16 %v1670
        %v1694 = vunpack.c.h.b16 %v1670
        %v1695 = vpack.c.b16 %v1679, %v1679
        %v1696 = vpack.c.b16 %v1680, %v1680
        %v1697 = vpack.c.b16 %v1681, %v1681
        %v1698 = vpack.c.b16 %v1682, %v1682
        %v1699 = vpack.c.b16 %v1683, %v1683
        %v1700 = vpack.c.b16 %v1684, %v1684
        %v1701 = vpack.c.b16 %v1685, %v1685
        %v1702 = vpack.c.b16 %v1686, %v1686
        %v1703 = vpack.c.b16 %v1687, %v1687
        %v1704 = vpack.c.b16 %v1688, %v1688
        %v1705 = vpack.c.b16 %v1689, %v1689
        %v1706 = vpack.c.b16 %v1690, %v1690
        %v1707 = vpack.c.b16 %v1691, %v1691
        %v1708 = vpack.c.b16 %v1692, %v1692
        %v1709 = vpack.c.b16 %v1693, %v1693
        %v1710 = vpack.c.b16 %v1694, %v1694
        %s1727 = scalar_lea.vmem %s303, 64 [#allocation9]
        %1728 = vst [vmem:[%s1727] sm:$0xf] %v1695
        %1729 = vst [vmem:[%s1727 + $0x4] sm:$0xf] %v1696
        %1730 = vst [vmem:[%s1727 + $0x8] sm:$0xf] %v1697
        %1731 = vst [vmem:[%s1727 + $0xc] sm:$0xf] %v1698
        %1732 = vst [vmem:[%s1727 + $0x10] sm:$0xf] %v1699
        %1733 = vst [vmem:[%s1727 + $0x14] sm:$0xf] %v1700
        %1734 = vst [vmem:[%s1727 + $0x18] sm:$0xf] %v1701
        %1735 = vst [vmem:[%s1727 + $0x1c] sm:$0xf] %v1702
        %1736 = vst [vmem:[%s1727 + $0x20] sm:$0xf] %v1703
        %1737 = vst [vmem:[%s1727 + $0x24] sm:$0xf] %v1704
        %1738 = vst [vmem:[%s1727 + $0x28] sm:$0xf] %v1705
        %1739 = vst [vmem:[%s1727 + $0x2c] sm:$0xf] %v1706
        %1740 = vst [vmem:[%s1727 + $0x30] sm:$0xf] %v1707
        %1741 = vst [vmem:[%s1727 + $0x34] sm:$0xf] %v1708
        %1742 = vst [vmem:[%s1727 + $0x38] sm:$0xf] %v1709
        %1743 = vst [vmem:[%s1727 + $0x3c] sm:$0xf] %v1710
        %v1744 = vpack.c.bf16 %v1238, %v1234
        %v1745 = vpack.c.bf16 %v1248, %v1244
        %v1746 = vpack.c.bf16 %v1258, %v1254
        %v1747 = vpack.c.bf16 %v1268, %v1264
        %v1748 = vpack.c.bf16 %v1278, %v1274
        %v1749 = vpack.c.bf16 %v1288, %v1284
        %v1750 = vpack.c.bf16 %v1298, %v1294
        %v1751 = vpack.c.bf16 %v1308, %v1304
        %v1760 = vunpack.c.l.b16 %v1744
        %v1761 = vunpack.c.h.b16 %v1744
        %v1762 = vunpack.c.l.b16 %v1745
        %v1763 = vunpack.c.h.b16 %v1745
        %v1764 = vunpack.c.l.b16 %v1746
        %v1765 = vunpack.c.h.b16 %v1746
        %v1766 = vunpack.c.l.b16 %v1747
        %v1767 = vunpack.c.h.b16 %v1747
        %v1768 = vunpack.c.l.b16 %v1748
        %v1769 = vunpack.c.h.b16 %v1748
        %v1770 = vunpack.c.l.b16 %v1749
        %v1771 = vunpack.c.h.b16 %v1749
        %v1772 = vunpack.c.l.b16 %v1750
        %v1773 = vunpack.c.h.b16 %v1750
        %v1774 = vunpack.c.l.b16 %v1751
        %v1775 = vunpack.c.h.b16 %v1751
        %v1776 = vpack.c.b16 %v1760, %v1760
        %v1777 = vpack.c.b16 %v1761, %v1761
        %v1778 = vpack.c.b16 %v1762, %v1762
        %v1779 = vpack.c.b16 %v1763, %v1763
        %v1780 = vpack.c.b16 %v1764, %v1764
        %v1781 = vpack.c.b16 %v1765, %v1765
        %v1782 = vpack.c.b16 %v1766, %v1766
        %v1783 = vpack.c.b16 %v1767, %v1767
        %v1784 = vpack.c.b16 %v1768, %v1768
        %v1785 = vpack.c.b16 %v1769, %v1769
        %v1786 = vpack.c.b16 %v1770, %v1770
        %v1787 = vpack.c.b16 %v1771, %v1771
        %v1788 = vpack.c.b16 %v1772, %v1772
        %v1789 = vpack.c.b16 %v1773, %v1773
        %v1790 = vpack.c.b16 %v1774, %v1774
        %v1791 = vpack.c.b16 %v1775, %v1775
        %s1808 = scalar_lea.vmem %s310, 64 [#allocation11]
        %1809 = vst [vmem:[%s1808] sm:$0xf] %v1776
        %1810 = vst [vmem:[%s1808 + $0x4] sm:$0xf] %v1777
        %1811 = vst [vmem:[%s1808 + $0x8] sm:$0xf] %v1778
        %1812 = vst [vmem:[%s1808 + $0xc] sm:$0xf] %v1779
        %1813 = vst [vmem:[%s1808 + $0x10] sm:$0xf] %v1780
        %1814 = vst [vmem:[%s1808 + $0x14] sm:$0xf] %v1781
        %1815 = vst [vmem:[%s1808 + $0x18] sm:$0xf] %v1782
        %1816 = vst [vmem:[%s1808 + $0x1c] sm:$0xf] %v1783
        %1817 = vst [vmem:[%s1808 + $0x20] sm:$0xf] %v1784
        %1818 = vst [vmem:[%s1808 + $0x24] sm:$0xf] %v1785
        %1819 = vst [vmem:[%s1808 + $0x28] sm:$0xf] %v1786
        %1820 = vst [vmem:[%s1808 + $0x2c] sm:$0xf] %v1787
        %1821 = vst [vmem:[%s1808 + $0x30] sm:$0xf] %v1788
        %1822 = vst [vmem:[%s1808 + $0x34] sm:$0xf] %v1789
        %1823 = vst [vmem:[%s1808 + $0x38] sm:$0xf] %v1790
        %1824 = vst [vmem:[%s1808 + $0x3c] sm:$0xf] %v1791
        %s1825 = sand.u32 %s119, 1
        %s1826 = scalar_lea.sflag [#allocation4], %s1825
        %s1827 = sand.u32 %s119, 1
        %s1828 = smul.addr %s1827, 128
        %s1829 = scalar_lea.vmem [#allocation8], %s1828
        %s1830 = sand.u32 %s27, 1
        %s1831 = scalar_lea.sflag [#allocation10], %s1830
        %s1832 = sand.u32 %s147, 1
        %s1833 = smul.addr %s1832, 128
        %s1834 = scalar_lea.vmem [#allocation9], %s1833
        %s1835 = sand.u32 %s27, 1
        %s1836 = scalar_lea.sflag [#allocation10], %s1835
        %s1837 = sand.u32 %s175, 1
        %s1838 = smul.addr %s1837, 128
        %s1839 = scalar_lea.vmem [#allocation11], %s1838
        // Predicated region
        $region45: #{tpu_custom_call.1} parent=31 // pred_check
          %p1840 = pneg %p129
        $region46: #{tpu_custom_call.1} parent=31 // pred_check_branch
          %1842 = sbr.rel (%p1840) target = $region48
        $region47: #{tpu_custom_call.1} parent=31 // pred_region
          %s1843 = smul.u32 16, %s32
          %s1845 = ssub.s32 2048, 2048
          %1846 = vsyncadd %s1826, %s1845
          %s1847 = smul.addr %s31, 32
          %s1848 = sadd.s32 %s1843, %s1847
          %s1849 = smul.addr %s1848, 64
          %s1850 = scalar_lea.hbm %s3, %s1849
          %s1851 = sshll.u32 %s1829, 4
          %s1852 = int_to_ptr.vmem [resolvable:$true] %s1851
          %1857 = dma.vmem_to_hbm [thread:$0]  %s1852, 2048, %s1850, %s1826, 64, 64, 4
        $region48: #{tpu_custom_call.1} parent=31 // pred_fallthru
          _
        // Predicated region
        $region49: #{tpu_custom_call.1} parent=31 // pred_check
          %p1858 = pneg %p157
        $region50: #{tpu_custom_call.1} parent=31 // pred_check_branch
          %1860 = sbr.rel (%p1858) target = $region52
        $region51: #{tpu_custom_call.1} parent=31 // pred_region
          %s1861 = smul.u32 16, %s32
          %s1863 = ssub.s32 2048, 2048
          %1864 = vsyncadd %s1831, %s1863
          %s1865 = smul.addr %s31, 32
          %s1866 = sadd.s32 %s1861, %s1865
          %s1867 = smul.addr %s1866, 64
          %s1868 = scalar_lea.hbm %s4, %s1867
          %s1869 = sshll.u32 %s1834, 4
          %s1870 = int_to_ptr.vmem [resolvable:$true] %s1869
          %1875 = dma.vmem_to_hbm [thread:$0]  %s1870, 2048, %s1868, %s1831, 64, 64, 4
        $region52: #{tpu_custom_call.1} parent=31 // pred_fallthru
          _
        // Predicated region
        $region53: #{tpu_custom_call.1} parent=31 // pred_check
          %p1876 = pneg %p185
        $region54: #{tpu_custom_call.1} parent=31 // pred_check_branch
          %1878 = sbr.rel (%p1876) target = $region56
        $region55: #{tpu_custom_call.1} parent=31 // pred_region
          %s1879 = smul.u32 16, %s32
          %s1881 = ssub.s32 2048, 2048
          %1882 = vsyncadd %s1836, %s1881
          %s1883 = smul.addr %s31, 32
          %s1884 = sadd.s32 %s1879, %s1883
          %s1885 = smul.addr %s1884, 64
          %s1886 = scalar_lea.hbm %s5, %s1885
          %s1887 = sshll.u32 %s1839, 4
          %s1888 = int_to_ptr.vmem [resolvable:$true] %s1887
          %1893 = dma.vmem_to_hbm [thread:$0]  %s1888, 2048, %s1886, %s1836, 64, 64, 4
        $region56: #{tpu_custom_call.1} parent=31 // pred_fallthru
          _
      $region32: #{tpu_custom_call.1} parent=5 // pred_fallthru
        _
      %p1894 = scmp.le.s32.totalorder 2, %s22
      // Predicated region
      $region57: #{tpu_custom_call.1} parent=5 // pred_check
        %p1895 = pneg %p1894
      $region58: #{tpu_custom_call.1} parent=5 // pred_check_branch
        %1897 = sbr.rel (%p1895) target = $region60
      $region59: #{tpu_custom_call.1} parent=5 // pred_region
        %s1898 = ssub.s32 %s22, 2
        // Predicated region
        $region61: #{tpu_custom_call.1} parent=59 // pred_check
          %p1899 = pneg %p135
        $region62: #{tpu_custom_call.1} parent=59 // pred_check_branch
          %1901 = sbr.rel (%p1899) target = $region64
        $region63: #{tpu_custom_call.1} parent=59 // pred_region
          %s1902 = sand.u32 %s120, 1
          %s1903 = scalar_lea.sflag [#allocation4], %s1902
          %s1904 = sand.u32 %s120, 1
          %s1905 = smul.addr %s1904, 128
          %s1906 = scalar_lea.vmem [#allocation8], %s1905
          %1907 = dma.done %s1903, 2048
        $region64: #{tpu_custom_call.1} parent=59 // pred_fallthru
          _
        // Predicated region
        $region65: #{tpu_custom_call.1} parent=59 // pred_check
          %p1908 = pneg %p163
        $region66: #{tpu_custom_call.1} parent=59 // pred_check_branch
          %1910 = sbr.rel (%p1908) target = $region68
        $region67: #{tpu_custom_call.1} parent=59 // pred_region
          %s1911 = sand.u32 %s28, 1
          %s1912 = scalar_lea.sflag [#allocation10], %s1911
          %s1913 = sand.u32 %s148, 1
          %s1914 = smul.addr %s1913, 128
          %s1915 = scalar_lea.vmem [#allocation9], %s1914
          %1916 = dma.done %s1912, 2048
        $region68: #{tpu_custom_call.1} parent=59 // pred_fallthru
          _
        // Predicated region
        $region69: #{tpu_custom_call.1} parent=59 // pred_check
          %p1917 = pneg %p191
        $region70: #{tpu_custom_call.1} parent=59 // pred_check_branch
          %1919 = sbr.rel (%p1917) target = $region72
        $region71: #{tpu_custom_call.1} parent=59 // pred_region
          %s1920 = sand.u32 %s28, 1
          %s1921 = scalar_lea.sflag [#allocation10], %s1920
          %s1922 = sand.u32 %s176, 1
          %s1923 = smul.addr %s1922, 128
          %s1924 = scalar_lea.vmem [#allocation11], %s1923
          %1925 = dma.done %s1921, 2048
        $region72: #{tpu_custom_call.1} parent=59 // pred_fallthru
          _
      $region60: #{tpu_custom_call.1} parent=5 // pred_fallthru
        _
    $region6: #{tpu_custom_call.1} parent=1 // loop_footer
      %s26 = sadd.s32 1, %s22
    $region7: #{tpu_custom_call.1} parent=1 // loop_footer_branch
      %21 = sbr.rel target = $region3
    $region8: #{tpu_custom_call.1} parent=1 // loop_exit
      _
    %1926 = vsyncpa [#allocation3], 1
    %s1927 = scalar_lea.sflag [#allocation3], 1
    %1928 = vsyncpa %s1927, 1
    %1929 = vsyncpa [#allocation6], 1
    %1930 = vsyncpa [#allocation4], 1
    %s1931 = scalar_lea.sflag [#allocation4], 1
    %1932 = vsyncpa %s1931, 1
    %1933 = vsyncpa [#allocation10], 1
    %s1934 = scalar_lea.sflag [#allocation10], 1
    %1935 = vsyncpa %s1934, 1

</llo_original>
